<compile_context>
chip_gen: v7x
topology: tpu7x:2x2x1
jax: 0.10.0
libtpu: 0.0.40
codegen_flags: <defaults>
</compile_context>

<pallas_src>
import jax
import jax.numpy as jnp
from jax.experimental import pallas as pl
from jax.experimental.pallas import tpu as pltpu


def basic_block_kernel(x_ref, w1_ref, w2_ref, s1_ref, b1_ref, s2_ref, b2_ref,
                       o_ref):
    """One (batch n, row-block hb) tile of the BasicBlock.

    x_ref  : (H, W, Cin)     f32, full (unpadded) input image for batch n
    w1_ref : (9*Cin, C)      bf16, conv1 weight, (kh, kw, Cin) folded into K
    w2_ref : (9*C,  C)       bf16, conv2 weight, (kh, kw, C) folded into K
    s*_ref : (1, 1, C)       f32, folded BN scale
    b*_ref : (1, 1, C)       f32, folded BN bias
    o_ref  : (BH, W, C)      out dtype, output row block
    """
    H, W, Cin = x_ref.shape
    BH, _, C = o_ref.shape
    R1 = BH + 2                              # conv1 rows incl. 1-row conv2 halo

    hb = pl.program_id(1)
    n_hb = pl.num_programs(1)
    row0 = pl.multiple_of(hb * BH, BH)

    # ---- gather the (BH+4)-row conv1 input window; H padding handled here ----
    body_f32 = x_ref[pl.ds(row0, BH)]                         # also the f32 identity
    top = x_ref[pl.ds(jnp.maximum(row0 - 2, 0), 2)]           # clamped, masked below
    top = jnp.where(hb == 0, jnp.zeros_like(top), top)        # rows -2,-1 -> zero pad
    bot = x_ref[pl.ds(jnp.minimum(row0 + BH, H - 2), 2)]
    bot = jnp.where(hb == n_hb - 1, jnp.zeros_like(bot), bot)  # rows H,H+1 -> zero pad
    xwin = jnp.concatenate([top, body_f32, bot], axis=0).astype(jnp.bfloat16)

    def shift_w(a, dw):
        # shifted[:, w, :] = a[:, w + dw, :], zero outside [0, W) (padding=1).
        zcol = jnp.zeros((a.shape[0], 1, a.shape[2]), a.dtype)
        if dw > 0:
            return jnp.concatenate([a[:, 1:, :], zcol], axis=1)
        return jnp.concatenate([zcol, a[:, :-1, :]], axis=1)

    def conv3x3(win, w_ref_, n_out_rows):
        # win: (n_out_rows + 2, W, K) bf16; w_ref_: (9*K, C) bf16.
        # Build the kw im2col patch once for the whole window, then fold the 3
        # kh taps in as row-offset slices -> a single MXU matmul with K' = 9*K.
        K = win.shape[-1]
        p3 = jnp.concatenate([shift_w(win, -1), win, shift_w(win, 1)], axis=-1)
        p9 = jnp.concatenate([p3[0:n_out_rows],
                              p3[1:n_out_rows + 1],
                              p3[2:n_out_rows + 2]], axis=-1)        # (R, W, 9K)
        return jnp.dot(p9.reshape(n_out_rows * W, 9 * K), w_ref_[...],
                       preferred_element_type=jnp.float32)           # (R*W, C) f32

    # ---- conv1 (with 1-row halo each side) -> bn1 (folded) -> relu ----
    acc1 = conv3x3(xwin, w1_ref, R1)
    h1 = acc1.reshape(R1, W, C) * s1_ref[...] + b1_ref[...]
    h1 = jnp.maximum(h1, 0.0)

    # Halo rows that fall outside the image are conv2's zero padding.
    rid = jax.lax.broadcasted_iota(jnp.int32, (R1, 1, 1), 0)
    keep = jnp.logical_and(jnp.logical_or(hb > 0, rid > 0),
                           jnp.logical_or(hb < n_hb - 1, rid < R1 - 1))
    mid = jnp.where(keep, h1, 0.0).astype(jnp.bfloat16)               # (BH+2, W, C)

    # ---- conv2 -> bn2 (folded) -> + f32 identity -> relu ----
    acc2 = conv3x3(mid, w2_ref, BH)
    out = acc2.reshape(BH, W, C) * s2_ref[...] + b2_ref[...]
    out = jnp.maximum(out + body_f32, 0.0)
    o_ref[...] = out.astype(o_ref.dtype)


def _fold_bn(gamma, beta, mean, var, eps):
    scale = gamma / jnp.sqrt(var + eps)
    bias = beta - mean * scale
    return (scale.reshape(1, 1, -1).astype(jnp.float32),
            bias.reshape(1, 1, -1).astype(jnp.float32))


def _fold_conv_weight(w_oihw):
    # OIHW -> HWIO -> flatten (kh, kw, Cin) into a single MXU contraction dim.
    cout, cin, kh, kw = w_oihw.shape
    return (jnp.transpose(w_oihw, (2, 3, 1, 0))
            .reshape(kh * kw * cin, cout).astype(jnp.bfloat16))


def _pick_block_rows(H, N, block_rows, max_block_rows=64):
    if block_rows is not None and 2 <= block_rows <= H and H % block_rows == 0:
        return block_rows
    cap = min(H, max_block_rows)
    if N == 1 and H >= 4:
        cap = min(cap, max(H // 2, 2))   # keep >= 2 grid steps for v7x's 2 TCs
    for cand in range(cap, 1, -1):
        if H % cand == 0:
            return cand
    return H   # prime H: single full-H block (correct, larger working set)


def basic_block_nhwc(x_nhwc, w1_oihw, w2_oihw, bn1, bn2, eps=1e-5,
                     block_rows=None, out_dtype=jnp.float32):
    """bn1/bn2 = (gamma, beta, running_mean, running_var). NHWC in, NHWC out."""
    N, H, W, Cin = x_nhwc.shape
    C = w1_oihw.shape[0]
    assert Cin == C, "downsample=None path requires in_channels == channels"

    w1 = _fold_conv_weight(w1_oihw)          # (9*Cin, C) bf16
    w2 = _fold_conv_weight(w2_oihw)          # (9*C,  C) bf16
    s1, b1 = _fold_bn(*bn1, eps)
    s2, b2 = _fold_bn(*bn2, eps)

    x = x_nhwc.astype(jnp.float32)
    BH = _pick_block_rows(H, N, block_rows)
    n_hb = H // BH

    flops = 2 * N * H * W * (9 * Cin * C + 9 * C * C)
    bytes_accessed = (x.size * 4 + w1.size * 2 + w2.size * 2 + 4 * C * 4
                      + N * H * W * C * jnp.dtype(out_dtype).itemsize)

    out = pl.pallas_call(
        basic_block_kernel,
        out_shape=jax.ShapeDtypeStruct((N, H, W, C), out_dtype),
        grid=(N, n_hb),
        in_specs=[
            # Full-H input window per batch element (re-used across hb steps).
            pl.BlockSpec((None, H, W, Cin), lambda n, hb: (n, 0, 0, 0)),
            pl.BlockSpec((9 * Cin, C), lambda n, hb: (0, 0)),
            pl.BlockSpec((9 * C, C), lambda n, hb: (0, 0)),
            pl.BlockSpec((1, 1, C), lambda n, hb: (0, 0, 0)),
            pl.BlockSpec((1, 1, C), lambda n, hb: (0, 0, 0)),
            pl.BlockSpec((1, 1, C), lambda n, hb: (0, 0, 0)),
            pl.BlockSpec((1, 1, C), lambda n, hb: (0, 0, 0)),
        ],
        out_specs=pl.BlockSpec((None, BH, W, C), lambda n, hb: (n, hb, 0, 0)),
        compiler_params=pltpu.CompilerParams(
            dimension_semantics=("parallel", "parallel"),
            vmem_limit_bytes=64 * 1024 * 1024,
        ),
        cost_estimate=pl.CostEstimate(flops=flops, transcendentals=0,
                                      bytes_accessed=bytes_accessed),
    )(x, w1, w2, s1, b1, s2, b2)
    return out


def basic_block(x_nchw, w1_oihw, w2_oihw, bn1, bn2, eps=1e-5,
                block_rows=None, out_dtype=jnp.float32):
    """PyTorch-layout (NCHW) compatibility wrapper.

    Prefer basic_block_nhwc at the op boundary to avoid the two full-tensor
    transpose passes.
    """
    x = jnp.transpose(x_nchw, (0, 2, 3, 1))                       # NCHW -> NHWC
    y = basic_block_nhwc(x, w1_oihw, w2_oihw, bn1, bn2, eps, block_rows, out_dtype)
    return jnp.transpose(y, (0, 3, 1, 2))                         # NHWC -> NCHW


def _reference(x_nchw, w1_oihw, w2_oihw, bn1, bn2, eps=1e-5):
    """Plain-JAX f32 reference (eval-mode BN), NCHW in / NCHW out."""
    x = jnp.transpose(x_nchw, (0, 2, 3, 1))
    w1 = jnp.transpose(w1_oihw, (2, 3, 1, 0))
    w2 = jnp.transpose(w2_oihw, (2, 3, 1, 0))
    s1, b1 = _fold_bn(*bn1, eps)
    s2, b2 = _fold_bn(*bn2, eps)
    dn = ('NHWC', 'HWIO', 'NHWC')
    y = jax.lax.conv_general_dilated(x, w1, (1, 1), 'SAME', dimension_numbers=dn,
                                     precision=jax.lax.Precision.HIGHEST)
    y = jnp.maximum(y * s1[None] + b1[None], 0.0)
    y = jax.lax.conv_general_dilated(y, w2, (1, 1), 'SAME', dimension_numbers=dn,
                                     precision=jax.lax.Precision.HIGHEST)
    y = y * s2[None] + b2[None]
    y = jnp.maximum(y + x, 0.0)
    return jnp.transpose(y, (0, 3, 1, 2))


if __name__ == "__main__":
    key = jax.random.PRNGKey(0)
    ks = jax.random.split(key, 12)

    N, C, H, W = 2, 4, 16, 16                                    # small, in=out channels
    x = jax.random.normal(ks[0], (N, C, H, W), jnp.float32)      # NCHW like PyTorch

    # conv weights, PyTorch OIHW shape (C_out, C_in, 3, 3), bias=False
    w1 = 0.2 * jax.random.normal(ks[1], (C, C, 3, 3), jnp.float32)
    w2 = 0.2 * jax.random.normal(ks[2], (C, C, 3, 3), jnp.float32)

    # BatchNorm2d params (gamma, beta, running_mean, running_var), eval mode
    bn1 = (jax.random.uniform(ks[3], (C,), minval=0.5, maxval=1.5),
           0.1 * jax.random.normal(ks[4], (C,)),
           0.1 * jax.random.normal(ks[5], (C,)),
           jax.random.uniform(ks[6], (C,), minval=0.5, maxval=1.5))
    bn2 = (jax.random.uniform(ks[7], (C,), minval=0.5, maxval=1.5),
           0.1 * jax.random.normal(ks[8], (C,)),
           0.1 * jax.random.normal(ks[9], (C,)),
           jax.random.uniform(ks[10], (C,), minval=0.5, maxval=1.5))

    ref = jax.block_until_ready(_reference(x, w1, w2, bn1, bn2))

    # 1) multi-row-block path (exercises the halo / boundary masking), f32 output
    out1 = jax.block_until_ready(basic_block(x, w1, w2, bn1, bn2, block_rows=8))
    assert out1.shape == (N, C, H, W), out1.shape
    err1 = float(jnp.max(jnp.abs(out1 - ref)))
    assert jnp.allclose(out1, ref, atol=5e-2, rtol=5e-2), err1

    # 2) default block selection + bf16 output store (halved HBM writeback)
    out2 = jax.block_until_ready(
        basic_block(x, w1, w2, bn1, bn2, out_dtype=jnp.bfloat16)).astype(jnp.float32)
    err2 = float(jnp.max(jnp.abs(out2 - ref)))
    assert jnp.allclose(out2, ref, atol=6e-2, rtol=6e-2), err2

    print("KERNEL_OK")
</pallas_src>

<mosaic_0001>
module attributes {stable_mosaic.version = 11 : i64} {
  func.func @basic_block_kernel(%arg0: i32, %arg1: i32, %arg2: memref<1x16x16x4xf32, #tpu.memory_space<vmem>>, %arg3: memref<36x4xbf16, #tpu.memory_space<vmem>>, %arg4: memref<36x4xbf16, #tpu.memory_space<vmem>>, %arg5: memref<1x1x4xf32, #tpu.memory_space<vmem>>, %arg6: memref<1x1x4xf32, #tpu.memory_space<vmem>>, %arg7: memref<1x1x4xf32, #tpu.memory_space<vmem>>, %arg8: memref<1x1x4xf32, #tpu.memory_space<vmem>>, %arg9: memref<1x8x16x4xf32, #tpu.memory_space<vmem>>) attributes {dimension_semantics = [#tpu.dimension_semantics<parallel>, #tpu.dimension_semantics<parallel>], iteration_bounds = array<i64: 2, 2>, scalar_prefetch = 0 : i64, scratch_operands = 0 : i64, tpu.core_type = #tpu.core_type<tc>, window_params = [{transform_indices = @transform_0, window_bounds = array<i64: 1, 16, 16, 4>}, {pipeline_mode = #tpu.pipeline_mode<synchronous>, transform_indices = @transform_1, window_bounds = array<i64: 36, 4>}, {pipeline_mode = #tpu.pipeline_mode<synchronous>, transform_indices = @transform_2, window_bounds = array<i64: 36, 4>}, {pipeline_mode = #tpu.pipeline_mode<synchronous>, transform_indices = @transform_3, window_bounds = array<i64: 1, 1, 4>}, {pipeline_mode = #tpu.pipeline_mode<synchronous>, transform_indices = @transform_4, window_bounds = array<i64: 1, 1, 4>}, {pipeline_mode = #tpu.pipeline_mode<synchronous>, transform_indices = @transform_5, window_bounds = array<i64: 1, 1, 4>}, {pipeline_mode = #tpu.pipeline_mode<synchronous>, transform_indices = @transform_6, window_bounds = array<i64: 1, 1, 4>}, {transform_indices = @transform_7, window_bounds = array<i64: 1, 8, 16, 4>}]} {
    %c8_i32 = arith.constant 8 : i32
    %0 = arith.muli %arg1, %c8_i32 : i32
    %1 = tpu.assume_multiple %0, 8 : i32
    %c0 = arith.constant 0 : index
    %2 = arith.index_cast %1 : i32 to index
    %c0_0 = arith.constant 0 : index
    %c0_1 = arith.constant 0 : index
    %3 = vector.load %arg2[%c0, %2, %c0_0, %c0_1] : memref<1x16x16x4xf32, #tpu.memory_space<vmem>>, vector<1x8x16x4xf32>
    %4 = vector.shape_cast %3 : vector<1x8x16x4xf32> to vector<8x16x4xf32>
    %c2_i32 = arith.constant 2 : i32
    %5 = arith.subi %1, %c2_i32 : i32
    %c0_i32 = arith.constant 0 : i32
    %6 = arith.maxsi %5, %c0_i32 : i32
    %c0_2 = arith.constant 0 : index
    %7 = arith.index_cast %6 : i32 to index
    %c0_3 = arith.constant 0 : index
    %c0_4 = arith.constant 0 : index
    %8 = vector.load %arg2[%c0_2, %7, %c0_3, %c0_4] : memref<1x16x16x4xf32, #tpu.memory_space<vmem>>, vector<1x2x16x4xf32>
    %9 = vector.shape_cast %8 : vector<1x2x16x4xf32> to vector<2x16x4xf32>
    %c0_i32_5 = arith.constant 0 : i32
    %10 = arith.cmpi eq, %arg1, %c0_i32_5 : i32
    %cst = arith.constant 0.000000e+00 : f32
    %11 = vector.broadcast %cst : f32 to vector<2x16x4xf32>
    %12 = arith.select %10, %11, %9 : vector<2x16x4xf32>
    %c8_i32_6 = arith.constant 8 : i32
    %13 = arith.addi %1, %c8_i32_6 : i32
    %c14_i32 = arith.constant 14 : i32
    %14 = arith.minsi %13, %c14_i32 : i32
    %c0_7 = arith.constant 0 : index
    %15 = arith.index_cast %14 : i32 to index
    %c0_8 = arith.constant 0 : index
    %c0_9 = arith.constant 0 : index
    %16 = vector.load %arg2[%c0_7, %15, %c0_8, %c0_9] : memref<1x16x16x4xf32, #tpu.memory_space<vmem>>, vector<1x2x16x4xf32>
    %17 = vector.shape_cast %16 : vector<1x2x16x4xf32> to vector<2x16x4xf32>
    %c1_i32 = arith.constant 1 : i32
    %18 = arith.cmpi eq, %arg1, %c1_i32 : i32
    %cst_10 = arith.constant 0.000000e+00 : f32
    %19 = vector.broadcast %cst_10 : f32 to vector<2x16x4xf32>
    %20 = arith.select %18, %19, %17 : vector<2x16x4xf32>
    %21 = tpu.concatenate %12, %4, %20 in 0 : vector<2x16x4xf32>, vector<8x16x4xf32>, vector<2x16x4xf32> -> vector<12x16x4xf32>
    %22 = arith.truncf %21 : vector<12x16x4xf32> to vector<12x16x4xbf16>
    %cst_11 = arith.constant 0.000000e+00 : bf16
    %23 = vector.broadcast %cst_11 : bf16 to vector<12x1x4xbf16>
    %24 = vector.extract_strided_slice %22 {offsets = [0, 0, 0], sizes = [12, 15, 4], strides = [1, 1, 1]} : vector<12x16x4xbf16> to vector<12x15x4xbf16>
    %25 = tpu.concatenate %23, %24 in 1 : vector<12x1x4xbf16>, vector<12x15x4xbf16> -> vector<12x16x4xbf16>
    %cst_12 = arith.constant 0.000000e+00 : bf16
    %26 = vector.broadcast %cst_12 : bf16 to vector<12x1x4xbf16>
    %27 = vector.extract_strided_slice %22 {offsets = [0, 1, 0], sizes = [12, 15, 4], strides = [1, 1, 1]} : vector<12x16x4xbf16> to vector<12x15x4xbf16>
    %28 = tpu.concatenate %27, %26 in 1 : vector<12x15x4xbf16>, vector<12x1x4xbf16> -> vector<12x16x4xbf16>
    %29 = tpu.concatenate %25, %22, %28 in 2 : vector<12x16x4xbf16>, vector<12x16x4xbf16>, vector<12x16x4xbf16> -> vector<12x16x12xbf16>
    %30 = vector.extract_strided_slice %29 {offsets = [0, 0, 0], sizes = [10, 16, 12], strides = [1, 1, 1]} : vector<12x16x12xbf16> to vector<10x16x12xbf16>
    %31 = vector.extract_strided_slice %29 {offsets = [1, 0, 0], sizes = [10, 16, 12], strides = [1, 1, 1]} : vector<12x16x12xbf16> to vector<10x16x12xbf16>
    %32 = vector.extract_strided_slice %29 {offsets = [2, 0, 0], sizes = [10, 16, 12], strides = [1, 1, 1]} : vector<12x16x12xbf16> to vector<10x16x12xbf16>
    %33 = tpu.concatenate %30, %31, %32 in 2 : vector<10x16x12xbf16>, vector<10x16x12xbf16>, vector<10x16x12xbf16> -> vector<10x16x36xbf16>
    %34 = vector.shape_cast %33 : vector<10x16x36xbf16> to vector<160x36xbf16>
    %c0_13 = arith.constant 0 : index
    %c0_14 = arith.constant 0 : index
    %35 = vector.load %arg3[%c0_13, %c0_14] : memref<36x4xbf16, #tpu.memory_space<vmem>>, vector<36x4xbf16>
    %cst_15 = arith.constant dense<0.000000e+00> : vector<160x4xf32>
    %36 = tpu.matmul %34, %35, %cst_15 {dimension_numbers = #tpu.dot_dimension_numbers<[1], [0], [0], [1], [0, 0, 1, 1], [], []>} : vector<160x36xbf16>, vector<36x4xbf16>, vector<160x4xf32> -> vector<160x4xf32>
    %37 = vector.shape_cast %36 : vector<160x4xf32> to vector<10x16x4xf32>
    %c0_16 = arith.constant 0 : index
    %c0_17 = arith.constant 0 : index
    %c0_18 = arith.constant 0 : index
    %38 = vector.load %arg5[%c0_16, %c0_17, %c0_18] : memref<1x1x4xf32, #tpu.memory_space<vmem>>, vector<1x1x4xf32>
    %39 = vector.broadcast %38 : vector<1x1x4xf32> to vector<10x16x4xf32>
    %40 = arith.mulf %37, %39 : vector<10x16x4xf32>
    %c0_19 = arith.constant 0 : index
    %c0_20 = arith.constant 0 : index
    %c0_21 = arith.constant 0 : index
    %41 = vector.load %arg6[%c0_19, %c0_20, %c0_21] : memref<1x1x4xf32, #tpu.memory_space<vmem>>, vector<1x1x4xf32>
    %42 = vector.broadcast %41 : vector<1x1x4xf32> to vector<10x16x4xf32>
    %43 = arith.addf %40, %42 : vector<10x16x4xf32>
    %cst_22 = arith.constant 0.000000e+00 : f32
    %44 = vector.broadcast %cst_22 : f32 to vector<10x16x4xf32>
    %45 = arith.maximumf %43, %44 : vector<10x16x4xf32>
    %46 = tpu.iota {dimensions = array<i32: 0>} : vector<10x1x1xi32>
    %c0_i32_23 = arith.constant 0 : i32
    %47 = arith.cmpi sgt, %arg1, %c0_i32_23 : i32
    %c0_i32_24 = arith.constant 0 : i32
    %48 = vector.broadcast %c0_i32_24 : i32 to vector<10x1x1xi32>
    %49 = arith.cmpi sgt, %46, %48 : vector<10x1x1xi32>
    %50 = vector.broadcast %47 : i1 to vector<10x1x1xi1>
    %51 = arith.ori %50, %49 : vector<10x1x1xi1>
    %c1_i32_25 = arith.constant 1 : i32
    %52 = arith.cmpi slt, %arg1, %c1_i32_25 : i32
    %c9_i32 = arith.constant 9 : i32
    %53 = vector.broadcast %c9_i32 : i32 to vector<10x1x1xi32>
    %54 = arith.cmpi slt, %46, %53 : vector<10x1x1xi32>
    %55 = vector.broadcast %52 : i1 to vector<10x1x1xi1>
    %56 = arith.ori %55, %54 : vector<10x1x1xi1>
    %57 = arith.andi %51, %56 : vector<10x1x1xi1>
    %cst_26 = arith.constant 0.000000e+00 : f32
    %58 = vector.shape_cast %57 : vector<10x1x1xi1> to vector<10x1x1xi1>
    %59 = vector.broadcast %58 : vector<10x1x1xi1> to vector<10x16x4xi1>
    %60 = vector.broadcast %cst_26 : f32 to vector<10x16x4xf32>
    %61 = arith.select %59, %45, %60 : vector<10x16x4xi1>, vector<10x16x4xf32>
    %62 = arith.truncf %61 : vector<10x16x4xf32> to vector<10x16x4xbf16>
    %cst_27 = arith.constant 0.000000e+00 : bf16
    %63 = vector.broadcast %cst_27 : bf16 to vector<10x1x4xbf16>
    %64 = vector.extract_strided_slice %62 {offsets = [0, 0, 0], sizes = [10, 15, 4], strides = [1, 1, 1]} : vector<10x16x4xbf16> to vector<10x15x4xbf16>
    %65 = tpu.concatenate %63, %64 in 1 : vector<10x1x4xbf16>, vector<10x15x4xbf16> -> vector<10x16x4xbf16>
    %cst_28 = arith.constant 0.000000e+00 : bf16
    %66 = vector.broadcast %cst_28 : bf16 to vector<10x1x4xbf16>
    %67 = vector.extract_strided_slice %62 {offsets = [0, 1, 0], sizes = [10, 15, 4], strides = [1, 1, 1]} : vector<10x16x4xbf16> to vector<10x15x4xbf16>
    %68 = tpu.concatenate %67, %66 in 1 : vector<10x15x4xbf16>, vector<10x1x4xbf16> -> vector<10x16x4xbf16>
    %69 = tpu.concatenate %65, %62, %68 in 2 : vector<10x16x4xbf16>, vector<10x16x4xbf16>, vector<10x16x4xbf16> -> vector<10x16x12xbf16>
    %70 = vector.extract_strided_slice %69 {offsets = [0, 0, 0], sizes = [8, 16, 12], strides = [1, 1, 1]} : vector<10x16x12xbf16> to vector<8x16x12xbf16>
    %71 = vector.extract_strided_slice %69 {offsets = [1, 0, 0], sizes = [8, 16, 12], strides = [1, 1, 1]} : vector<10x16x12xbf16> to vector<8x16x12xbf16>
    %72 = vector.extract_strided_slice %69 {offsets = [2, 0, 0], sizes = [8, 16, 12], strides = [1, 1, 1]} : vector<10x16x12xbf16> to vector<8x16x12xbf16>
    %73 = tpu.concatenate %70, %71, %72 in 2 : vector<8x16x12xbf16>, vector<8x16x12xbf16>, vector<8x16x12xbf16> -> vector<8x16x36xbf16>
    %74 = vector.shape_cast %73 : vector<8x16x36xbf16> to vector<128x36xbf16>
    %c0_29 = arith.constant 0 : index
    %c0_30 = arith.constant 0 : index
    %75 = vector.load %arg4[%c0_29, %c0_30] : memref<36x4xbf16, #tpu.memory_space<vmem>>, vector<36x4xbf16>
    %cst_31 = arith.constant dense<0.000000e+00> : vector<128x4xf32>
    %76 = tpu.matmul %74, %75, %cst_31 {dimension_numbers = #tpu.dot_dimension_numbers<[1], [0], [0], [1], [0, 0, 1, 1], [], []>} : vector<128x36xbf16>, vector<36x4xbf16>, vector<128x4xf32> -> vector<128x4xf32>
    %77 = vector.shape_cast %76 : vector<128x4xf32> to vector<8x16x4xf32>
    %c0_32 = arith.constant 0 : index
    %c0_33 = arith.constant 0 : index
    %c0_34 = arith.constant 0 : index
    %78 = vector.load %arg7[%c0_32, %c0_33, %c0_34] : memref<1x1x4xf32, #tpu.memory_space<vmem>>, vector<1x1x4xf32>
    %79 = vector.broadcast %78 : vector<1x1x4xf32> to vector<8x16x4xf32>
    %80 = arith.mulf %77, %79 : vector<8x16x4xf32>
    %c0_35 = arith.constant 0 : index
    %c0_36 = arith.constant 0 : index
    %c0_37 = arith.constant 0 : index
    %81 = vector.load %arg8[%c0_35, %c0_36, %c0_37] : memref<1x1x4xf32, #tpu.memory_space<vmem>>, vector<1x1x4xf32>
    %82 = vector.broadcast %81 : vector<1x1x4xf32> to vector<8x16x4xf32>
    %83 = arith.addf %80, %82 : vector<8x16x4xf32>
    %84 = arith.addf %83, %4 : vector<8x16x4xf32>
    %cst_38 = arith.constant 0.000000e+00 : f32
    %85 = vector.broadcast %cst_38 : f32 to vector<8x16x4xf32>
    %86 = arith.maximumf %84, %85 : vector<8x16x4xf32>
    %c0_39 = arith.constant 0 : index
    %c0_40 = arith.constant 0 : index
    %c0_41 = arith.constant 0 : index
    %c0_42 = arith.constant 0 : index
    %87 = vector.load %arg9[%c0_39, %c0_40, %c0_41, %c0_42] : memref<1x8x16x4xf32, #tpu.memory_space<vmem>>, vector<1x8x16x4xf32>
    %88 = vector.shape_cast %87 : vector<1x8x16x4xf32> to vector<8x16x4xf32>
    %89 = vector.shape_cast %86 : vector<8x16x4xf32> to vector<1x8x16x4xf32>
    tpu.vector_store %arg9[%c0_39, %c0_40, %c0_41, %c0_42], %89 {strides = array<i32>} : memref<1x8x16x4xf32, #tpu.memory_space<vmem>>, vector<1x8x16x4xf32>,
    return
  }
  func.func @transform_0(%arg0: i32, %arg1: i32) -> (i32, i32, i32, i32) {
    %c0_i32 = arith.constant 0 : i32
    %c0_i32_0 = arith.constant 0 : i32
    %c0_i32_1 = arith.constant 0 : i32
    %c0_i32_2 = arith.constant 0 : i32
    return %arg0, %c0_i32, %c0_i32_0, %c0_i32_1 : i32, i32, i32, i32
  }
  func.func @transform_1(%arg0: i32, %arg1: i32) -> (i32, i32) {
    %c0_i32 = arith.constant 0 : i32
    %c0_i32_0 = arith.constant 0 : i32
    %c0_i32_1 = arith.constant 0 : i32
    return %c0_i32, %c0_i32_0 : i32, i32
  }
  func.func @transform_2(%arg0: i32, %arg1: i32) -> (i32, i32) {
    %c0_i32 = arith.constant 0 : i32
    %c0_i32_0 = arith.constant 0 : i32
    %c0_i32_1 = arith.constant 0 : i32
    return %c0_i32, %c0_i32_0 : i32, i32
  }
  func.func @transform_3(%arg0: i32, %arg1: i32) -> (i32, i32, i32) {
    %c0_i32 = arith.constant 0 : i32
    %c0_i32_0 = arith.constant 0 : i32
    %c0_i32_1 = arith.constant 0 : i32
    %c0_i32_2 = arith.constant 0 : i32
    return %c0_i32, %c0_i32_0, %c0_i32_1 : i32, i32, i32
  }
  func.func @transform_4(%arg0: i32, %arg1: i32) -> (i32, i32, i32) {
    %c0_i32 = arith.constant 0 : i32
    %c0_i32_0 = arith.constant 0 : i32
    %c0_i32_1 = arith.constant 0 : i32
    %c0_i32_2 = arith.constant 0 : i32
    return %c0_i32, %c0_i32_0, %c0_i32_1 : i32, i32, i32
  }
  func.func @transform_5(%arg0: i32, %arg1: i32) -> (i32, i32, i32) {
    %c0_i32 = arith.constant 0 : i32
    %c0_i32_0 = arith.constant 0 : i32
    %c0_i32_1 = arith.constant 0 : i32
    %c0_i32_2 = arith.constant 0 : i32
    return %c0_i32, %c0_i32_0, %c0_i32_1 : i32, i32, i32
  }
  func.func @transform_6(%arg0: i32, %arg1: i32) -> (i32, i32, i32) {
    %c0_i32 = arith.constant 0 : i32
    %c0_i32_0 = arith.constant 0 : i32
    %c0_i32_1 = arith.constant 0 : i32
    %c0_i32_2 = arith.constant 0 : i32
    return %c0_i32, %c0_i32_0, %c0_i32_1 : i32, i32, i32
  }
  func.func @transform_7(%arg0: i32, %arg1: i32) -> (i32, i32, i32, i32) {
    %c0_i32 = arith.constant 0 : i32
    %c0_i32_0 = arith.constant 0 : i32
    %c0_i32_1 = arith.constant 0 : i32
    return %arg0, %arg1, %c0_i32, %c0_i32_0 : i32, i32, i32, i32
  }
}

</mosaic_0001>

<llo_original>
// kernel: tpu_custom_call.1
$region0: #{tpu_custom_call.1}
  #allocation0 [shape = 'u32[]', space=smem, size = 0x4, offset = 0x4, fixed_abs, tag = 'smem constant byte address 0x4 - core index']
  #allocation1 [shape = 'u32[144,128]{1,0:T(1,128)}', space=vmem, size = 0x12000, scoped, tag = 'internal scratch']
  %s0 = inlined_call_operand.hbm [shape: f32[2,16,16,4], index: 0, kind: input, shape index: {}]
  %s1 = inlined_call_operand.hbm [shape: bf16[36,4], index: 1, kind: input, shape index: {}]
  %s2 = inlined_call_operand.hbm [shape: bf16[36,4], index: 2, kind: input, shape index: {}]
  %s3 = inlined_call_operand.hbm [shape: f32[1,1,4], index: 3, kind: input, shape index: {}]
  %s4 = inlined_call_operand.hbm [shape: f32[1,1,4], index: 4, kind: input, shape index: {}]
  %s5 = inlined_call_operand.hbm [shape: f32[1,1,4], index: 5, kind: input, shape index: {}]
  %s6 = inlined_call_operand.hbm [shape: f32[1,1,4], index: 6, kind: input, shape index: {}]
  %s7 = inlined_call_operand.hbm [shape: f32[2,16,16,4], index: 7, kind: output, shape index: {}]
  %s8 = sld [smem:[#allocation0]]
  $region89: #{tpu_custom_call.1} parent=0
    _
  %s10 = ssub.s32 1, %s8
  %s11 = scalar_select 0, %s10, %s8
  $region1: #{tpu_custom_call.1} parent=0
    #allocation2 [shape = 'u8[262144]{0}', space=vmem, size = 0x40000, scoped, tag = 'input window, operand 0']
    #allocation3 [shape = 's32[2]{0}', space=sflag, size = 0x8, scoped, tag = 'scoped memory for tpu_custom_call.1']
    #allocation4 [shape = 's32[2]{0}', space=sflag, size = 0x8, scoped, tag = 'scoped memory for tpu_custom_call.1']
    #allocation5 [shape = 'u8[10240]{0}', space=vmem, size = 0x2800, scoped, tag = 'input window, operand 1, single buffered']
    #allocation6 [shape = 's32[1]{0}', space=sflag, size = 0x4, scoped, tag = 'scoped memory for tpu_custom_call.1']
    #allocation7 [shape = 'u8[10240]{0}', space=vmem, size = 0x2800, scoped, tag = 'input window, operand 2, single buffered']
    #allocation8 [shape = 'u8[512]{0}', space=vmem, size = 0x400, scoped, tag = 'input window, operand 3, single buffered']
    #allocation9 [shape = 's32[1]{0}', space=sflag, size = 0x4, scoped, tag = 'scoped memory for tpu_custom_call.1']
    #allocation10 [shape = 'u8[512]{0}', space=vmem, size = 0x400, scoped, tag = 'input window, operand 4, single buffered']
    #allocation11 [shape = 'u8[512]{0}', space=vmem, size = 0x400, scoped, tag = 'input window, operand 5, single buffered']
    #allocation12 [shape = 's32[1]{0}', space=sflag, size = 0x4, scoped, tag = 'scoped memory for tpu_custom_call.1']
    #allocation13 [shape = 'u8[512]{0}', space=vmem, size = 0x400, scoped, tag = 'input window, operand 6, single buffered']
    #allocation14 [shape = 'u8[131072]{0}', space=vmem, size = 0x20000, scoped, tag = 'output window, operand 0']
    %12 = vsyncpa [#allocation3], 0
    %s13 = scalar_lea.sflag [#allocation3], 1
    %14 = vsyncpa %s13, 0
    %15 = vsyncpa [#allocation6], 0
    %16 = vsyncpa [#allocation9], 0
    %17 = vsyncpa [#allocation12], 0
    %18 = vsyncpa [#allocation4], 0
    %s19 = scalar_lea.sflag [#allocation4], 1
    %20 = vsyncpa %s19, 0
    loop: start=0, step=1, limit=6
    $region2: #{tpu_custom_call.1} parent=1 // loop_pre_header
      _
    $region3: #{tpu_custom_call.1} parent=1 // loop_header
      %s22 = sphi 0, %s26
      %p23 = scmp.ge.s32.totalorder %s22, 6
      %s29 = sphi 0, %s41
      %s30 = sphi 0, %s37
      %s31 = sphi 0, %s29
      %s32 = sphi 0, %s30
      %s33 = sphi 0, %s31
      %s34 = sphi 0, %s32
      %s44 = sphi 0, %s46
      %s47 = sphi 0, %s44
      %s48 = sphi 0, %s47
      %s64 = sphi 0, %s48
      %s68 = sphi 0, %s68
      %s70 = sphi 0, %s68
      %s71 = sphi 0, %s70
      %s85 = sphi 0, %s71
      %s89 = sphi 0, %s89
      %s91 = sphi 0, %s89
      %s92 = sphi 0, %s91
      %s106 = sphi 0, %s92
      %s110 = sphi 0, %s110
      %s112 = sphi 0, %s110
      %s113 = sphi 0, %s112
      %s127 = sphi 0, %s113
      %s131 = sphi 0, %s131
      %s133 = sphi 0, %s131
      %s134 = sphi 0, %s133
      %s148 = sphi 0, %s134
      %s152 = sphi 0, %s152
      %s154 = sphi 0, %s152
      %s155 = sphi 0, %s154
      %s169 = sphi 0, %s155
      %s173 = sphi 0, %s173
      %s175 = sphi 0, %s173
      %s176 = sphi 0, %s175
      %s190 = sphi 0, %s176
      %s198 = sphi 0, %s200
      %s201 = sphi 0, %s198
      %s202 = sphi 0, %s201
      %s218 = sphi 0, %s202
    $region4: #{tpu_custom_call.1} parent=1 // loop_header_branch
      %25 = sbr.rel (%p23) target = $region8
    $region5: #{tpu_custom_call.1} parent=1 // loop_body
      %s27 = ssub.s32 %s22, 1
      %s28 = ssub.s32 %s22, 2
      %s35 = sadd.s32 1, %s30
      %p36 = scmp.ge.s32.totalorder %s35, 2
      %s37 = scalar_select %p36, 0, %s35
      %s38 = sadd.s32 1, %s29
      %s39 = scalar_select %p36, %s38, %s29
      %p40 = scmp.ge.s32.totalorder %s39, 2
      %s41 = scalar_select %p40, 0, %s39
      %s42 = ssub.s32 %s29, %s41
      %p43 = scmp.eq.s32.totalorder %s42, 0
      %s45 = sadd.s32 %s44, 1
      %s46 = scalar_select %p43, %s44, %s45
      %p49 = pneg %p43
      %p50 = scmp.eq.s32.totalorder %s22, 3
      %p51 = por %p49, %p50
      %p52 = scmp.ne.s32.totalorder %s44, %s47
      %p53 = scmp.eq.s32.totalorder %s22, 0
      %p54 = por %p52, %p53
      %p55 = scmp.ne.s32.totalorder %s44, %s47
      %p56 = scmp.eq.s32.totalorder %s27, 3
      %p57 = por %p55, %p56
      %p58 = scmp.ne.s32.totalorder %s47, %s48
      %p59 = scmp.eq.s32.totalorder %s27, 0
      %p60 = por %p58, %p59
      %p61 = scmp.ne.s32.totalorder %s47, %s48
      %p62 = scmp.eq.s32.totalorder %s28, 3
      %p63 = por %p61, %p62
      %p65 = scmp.ne.s32.totalorder %s48, %s64
      %p66 = scmp.eq.s32.totalorder %s28, 0
      %p67 = por %p65, %p66
      %s69 = sadd.s32 %s68, 1
      %p72 = scmp.eq.s32.totalorder %s22, 3
      %p73 = scmp.ne.s32.totalorder %s68, %s70
      %p74 = scmp.eq.s32.totalorder %s22, 0
      %p75 = por %p73, %p74
      %p76 = scmp.ne.s32.totalorder %s68, %s70
      %p77 = scmp.eq.s32.totalorder %s27, 3
      %p78 = por %p76, %p77
      %p79 = scmp.ne.s32.totalorder %s70, %s71
      %p80 = scmp.eq.s32.totalorder %s27, 0
      %p81 = por %p79, %p80
      %p82 = scmp.ne.s32.totalorder %s70, %s71
      %p83 = scmp.eq.s32.totalorder %s28, 3
      %p84 = por %p82, %p83
      %p86 = scmp.ne.s32.totalorder %s71, %s85
      %p87 = scmp.eq.s32.totalorder %s28, 0
      %p88 = por %p86, %p87
      %s90 = sadd.s32 %s89, 1
      %p93 = scmp.eq.s32.totalorder %s22, 3
      %p94 = scmp.ne.s32.totalorder %s89, %s91
      %p95 = scmp.eq.s32.totalorder %s22, 0
      %p96 = por %p94, %p95
      %p97 = scmp.ne.s32.totalorder %s89, %s91
      %p98 = scmp.eq.s32.totalorder %s27, 3
      %p99 = por %p97, %p98
      %p100 = scmp.ne.s32.totalorder %s91, %s92
      %p101 = scmp.eq.s32.totalorder %s27, 0
      %p102 = por %p100, %p101
      %p103 = scmp.ne.s32.totalorder %s91, %s92
      %p104 = scmp.eq.s32.totalorder %s28, 3
      %p105 = por %p103, %p104
      %p107 = scmp.ne.s32.totalorder %s92, %s106
      %p108 = scmp.eq.s32.totalorder %s28, 0
      %p109 = por %p107, %p108
      %s111 = sadd.s32 %s110, 1
      %p114 = scmp.eq.s32.totalorder %s22, 3
      %p115 = scmp.ne.s32.totalorder %s110, %s112
      %p116 = scmp.eq.s32.totalorder %s22, 0
      %p117 = por %p115, %p116
      %p118 = scmp.ne.s32.totalorder %s110, %s112
      %p119 = scmp.eq.s32.totalorder %s27, 3
      %p120 = por %p118, %p119
      %p121 = scmp.ne.s32.totalorder %s112, %s113
      %p122 = scmp.eq.s32.totalorder %s27, 0
      %p123 = por %p121, %p122
      %p124 = scmp.ne.s32.totalorder %s112, %s113
      %p125 = scmp.eq.s32.totalorder %s28, 3
      %p126 = por %p124, %p125
      %p128 = scmp.ne.s32.totalorder %s113, %s127
      %p129 = scmp.eq.s32.totalorder %s28, 0
      %p130 = por %p128, %p129
      %s132 = sadd.s32 %s131, 1
      %p135 = scmp.eq.s32.totalorder %s22, 3
      %p136 = scmp.ne.s32.totalorder %s131, %s133
      %p137 = scmp.eq.s32.totalorder %s22, 0
      %p138 = por %p136, %p137
      %p139 = scmp.ne.s32.totalorder %s131, %s133
      %p140 = scmp.eq.s32.totalorder %s27, 3
      %p141 = por %p139, %p140
      %p142 = scmp.ne.s32.totalorder %s133, %s134
      %p143 = scmp.eq.s32.totalorder %s27, 0
      %p144 = por %p142, %p143
      %p145 = scmp.ne.s32.totalorder %s133, %s134
      %p146 = scmp.eq.s32.totalorder %s28, 3
      %p147 = por %p145, %p146
      %p149 = scmp.ne.s32.totalorder %s134, %s148
      %p150 = scmp.eq.s32.totalorder %s28, 0
      %p151 = por %p149, %p150
      %s153 = sadd.s32 %s152, 1
      %p156 = scmp.eq.s32.totalorder %s22, 3
      %p157 = scmp.ne.s32.totalorder %s152, %s154
      %p158 = scmp.eq.s32.totalorder %s22, 0
      %p159 = por %p157, %p158
      %p160 = scmp.ne.s32.totalorder %s152, %s154
      %p161 = scmp.eq.s32.totalorder %s27, 3
      %p162 = por %p160, %p161
      %p163 = scmp.ne.s32.totalorder %s154, %s155
      %p164 = scmp.eq.s32.totalorder %s27, 0
      %p165 = por %p163, %p164
      %p166 = scmp.ne.s32.totalorder %s154, %s155
      %p167 = scmp.eq.s32.totalorder %s28, 3
      %p168 = por %p166, %p167
      %p170 = scmp.ne.s32.totalorder %s155, %s169
      %p171 = scmp.eq.s32.totalorder %s28, 0
      %p172 = por %p170, %p171
      %s174 = sadd.s32 %s173, 1
      %p177 = scmp.eq.s32.totalorder %s22, 3
      %p178 = scmp.ne.s32.totalorder %s173, %s175
      %p179 = scmp.eq.s32.totalorder %s22, 0
      %p180 = por %p178, %p179
      %p181 = scmp.ne.s32.totalorder %s173, %s175
      %p182 = scmp.eq.s32.totalorder %s27, 3
      %p183 = por %p181, %p182
      %p184 = scmp.ne.s32.totalorder %s175, %s176
      %p185 = scmp.eq.s32.totalorder %s27, 0
      %p186 = por %p184, %p185
      %p187 = scmp.ne.s32.totalorder %s175, %s176
      %p188 = scmp.eq.s32.totalorder %s28, 3
      %p189 = por %p187, %p188
      %p191 = scmp.ne.s32.totalorder %s176, %s190
      %p192 = scmp.eq.s32.totalorder %s28, 0
      %p193 = por %p191, %p192
      %s194 = ssub.s32 %s29, %s41
      %s195 = ssub.s32 %s30, %s37
      %s196 = sor.u32 %s194, %s195
      %p197 = scmp.eq.s32.totalorder %s196, 0
      %s199 = sadd.s32 %s198, 1
      %s200 = scalar_select %p197, %s198, %s199
      %p203 = pneg %p197
      %p204 = scmp.eq.s32.totalorder %s22, 3
      %p205 = por %p203, %p204
      %p206 = scmp.ne.s32.totalorder %s198, %s201
      %p207 = scmp.eq.s32.totalorder %s22, 0
      %p208 = por %p206, %p207
      %p209 = scmp.ne.s32.totalorder %s198, %s201
      %p210 = scmp.eq.s32.totalorder %s27, 3
      %p211 = por %p209, %p210
      %p212 = scmp.ne.s32.totalorder %s201, %s202
      %p213 = scmp.eq.s32.totalorder %s27, 0
      %p214 = por %p212, %p213
      %p215 = scmp.ne.s32.totalorder %s201, %s202
      %p216 = scmp.eq.s32.totalorder %s28, 3
      %p217 = por %p215, %p216
      %p219 = scmp.ne.s32.totalorder %s202, %s218
      %p220 = scmp.eq.s32.totalorder %s28, 0
      %p221 = por %p219, %p220
      %p222 = scmp.le.s32.totalorder 1, %s22
      %p223 = scmp.lt.s32.totalorder %s22, 5
      %p224 = pnand %p222, %p223
      %p225 = pneg %p224
      // Predicated region
      $region9: #{tpu_custom_call.1} parent=5 // pred_check
        _
      $region10: #{tpu_custom_call.1} parent=5 // pred_check_branch
        %227 = sbr.rel (%p224) target = $region12
      $region11: #{tpu_custom_call.1} parent=5 // pred_region
        %s228 = ssub.s32 %s22, 1
        // Predicated region
        $region13: #{tpu_custom_call.1} parent=11 // pred_check
          %p229 = pneg %p81
        $region14: #{tpu_custom_call.1} parent=11 // pred_check_branch
          %231 = sbr.rel (%p229) target = $region16
        $region15: #{tpu_custom_call.1} parent=11 // pred_region
          %s233 = ssub.s32 320, 320
          %234 = vsyncadd [#allocation6], %s233
          %s235 = sshll.u32 [#allocation5], 4
          %s236 = int_to_ptr.vmem [resolvable:$true] %s235
          %241 = dma.hbm_to_vmem [thread:$0]  %s1, 320, %s236, [#allocation6], 64, 64, 4
        $region16: #{tpu_custom_call.1} parent=11 // pred_fallthru
          _
        // Predicated region
        $region17: #{tpu_custom_call.1} parent=11 // pred_check
          %p242 = pneg %p102
        $region18: #{tpu_custom_call.1} parent=11 // pred_check_branch
          %244 = sbr.rel (%p242) target = $region20
        $region19: #{tpu_custom_call.1} parent=11 // pred_region
          %s246 = ssub.s32 320, 320
          %247 = vsyncadd [#allocation6], %s246
          %s248 = sshll.u32 [#allocation7], 4
          %s249 = int_to_ptr.vmem [resolvable:$true] %s248
          %254 = dma.hbm_to_vmem [thread:$0]  %s2, 320, %s249, [#allocation6], 64, 64, 4
        $region20: #{tpu_custom_call.1} parent=11 // pred_fallthru
          _
        // Predicated region
        $region21: #{tpu_custom_call.1} parent=11 // pred_check
          %p255 = pneg %p123
        $region22: #{tpu_custom_call.1} parent=11 // pred_check_branch
          %257 = sbr.rel (%p255) target = $region24
        $region23: #{tpu_custom_call.1} parent=11 // pred_region
          %s259 = ssub.s32 16, 16
          %260 = vsyncadd [#allocation9], %s259
          %s262 = sshll.u32 [#allocation8], 4
          %s263 = int_to_ptr.vmem [resolvable:$true] %s262
          %265 = dma.hbm_to_vmem [thread:$0]  %s3, 16, %s263, [#allocation9]
        $region24: #{tpu_custom_call.1} parent=11 // pred_fallthru
          _
        // Predicated region
        $region25: #{tpu_custom_call.1} parent=11 // pred_check
          %p266 = pneg %p144
        $region26: #{tpu_custom_call.1} parent=11 // pred_check_branch
          %268 = sbr.rel (%p266) target = $region28
        $region27: #{tpu_custom_call.1} parent=11 // pred_region
          %s270 = ssub.s32 16, 16
          %271 = vsyncadd [#allocation9], %s270
          %s273 = sshll.u32 [#allocation10], 4
          %s274 = int_to_ptr.vmem [resolvable:$true] %s273
          %276 = dma.hbm_to_vmem [thread:$0]  %s4, 16, %s274, [#allocation9]
        $region28: #{tpu_custom_call.1} parent=11 // pred_fallthru
          _
        // Predicated region
        $region29: #{tpu_custom_call.1} parent=11 // pred_check
          %p277 = pneg %p165
        $region30: #{tpu_custom_call.1} parent=11 // pred_check_branch
          %279 = sbr.rel (%p277) target = $region32
        $region31: #{tpu_custom_call.1} parent=11 // pred_region
          %s281 = ssub.s32 16, 16
          %282 = vsyncadd [#allocation12], %s281
          %s284 = sshll.u32 [#allocation11], 4
          %s285 = int_to_ptr.vmem [resolvable:$true] %s284
          %287 = dma.hbm_to_vmem [thread:$0]  %s5, 16, %s285, [#allocation12]
        $region32: #{tpu_custom_call.1} parent=11 // pred_fallthru
          _
        // Predicated region
        $region33: #{tpu_custom_call.1} parent=11 // pred_check
          %p288 = pneg %p186
        $region34: #{tpu_custom_call.1} parent=11 // pred_check_branch
          %290 = sbr.rel (%p288) target = $region36
        $region35: #{tpu_custom_call.1} parent=11 // pred_region
          %s292 = ssub.s32 16, 16
          %293 = vsyncadd [#allocation12], %s292
          %s295 = sshll.u32 [#allocation13], 4
          %s296 = int_to_ptr.vmem [resolvable:$true] %s295
          %298 = dma.hbm_to_vmem [thread:$0]  %s6, 16, %s296, [#allocation12]
        $region36: #{tpu_custom_call.1} parent=11 // pred_fallthru
          _
      $region12: #{tpu_custom_call.1} parent=5 // pred_fallthru
        _
      %p299 = scmp.lt.s32.totalorder %s22, 4
      // Predicated region
      $region37: #{tpu_custom_call.1} parent=5 // pred_check
        %p300 = pneg %p299
      $region38: #{tpu_custom_call.1} parent=5 // pred_check_branch
        %302 = sbr.rel (%p300) target = $region40
      $region39: #{tpu_custom_call.1} parent=5 // pred_region
        // Predicated region
        $region41: #{tpu_custom_call.1} parent=39 // pred_check
          %p303 = pneg %p54
        $region42: #{tpu_custom_call.1} parent=39 // pred_check_branch
          %305 = sbr.rel (%p303) target = $region44
        $region43: #{tpu_custom_call.1} parent=39 // pred_region
          %s306 = sand.u32 %s44, 1
          %s307 = scalar_lea.sflag [#allocation3], %s306
          %s308 = sand.u32 %s44, 1
          %s309 = smul.addr %s308, 256
          %s310 = scalar_lea.vmem [#allocation2], %s309
          %s312 = ssub.s32 4096, 4096
          %313 = vsyncadd %s307, %s312
          %s314 = smul.addr %s29, 32
          %s315 = smul.addr %s314, 128
          %s316 = scalar_lea.hbm %s0, %s315
          %s317 = sshll.u32 %s310, 4
          %s318 = int_to_ptr.vmem [resolvable:$true] %s317
          %323 = dma.hbm_to_vmem [thread:$0]  %s316, 4096, %s318, %s307, 128, 128, 8
        $region44: #{tpu_custom_call.1} parent=39 // pred_fallthru
          _
      $region40: #{tpu_custom_call.1} parent=5 // pred_fallthru
        _
      %p324 = scmp.le.s32.totalorder 1, %s22
      %p325 = scmp.lt.s32.totalorder %s22, 5
      %p326 = pnand %p324, %p325
      %p327 = pneg %p326
      // Predicated region
      $region45: #{tpu_custom_call.1} parent=5 // pred_check
        _
      $region46: #{tpu_custom_call.1} parent=5 // pred_check_branch
        %329 = sbr.rel (%p326) target = $region48
      $region47: #{tpu_custom_call.1} parent=5 // pred_region
        %s330 = ssub.s32 %s22, 1
        %s331 = sand.u32 %s47, 1
        %s332 = scalar_lea.sflag [#allocation3], %s331
        %s333 = sand.u32 %s47, 1
        %s334 = smul.addr %s333, 256
        %s335 = scalar_lea.vmem [#allocation2], %s334
        // Predicated region
        $region49: #{tpu_custom_call.1} parent=47 // pred_check
          %p336 = pneg %p60
        $region50: #{tpu_custom_call.1} parent=47 // pred_check_branch
          %338 = sbr.rel (%p336) target = $region52
        $region51: #{tpu_custom_call.1} parent=47 // pred_region
          %339 = dma.done %s332, 4096
        $region52: #{tpu_custom_call.1} parent=47 // pred_fallthru
          _
        // Predicated region
        $region53: #{tpu_custom_call.1} parent=47 // pred_check
          %p340 = pneg %p81
        $region54: #{tpu_custom_call.1} parent=47 // pred_check_branch
          %342 = sbr.rel (%p340) target = $region56
        $region55: #{tpu_custom_call.1} parent=47 // pred_region
          %343 = dma.done [#allocation6], 320
        $region56: #{tpu_custom_call.1} parent=47 // pred_fallthru
          _
        // Predicated region
        $region57: #{tpu_custom_call.1} parent=47 // pred_check
          %p344 = pneg %p102
        $region58: #{tpu_custom_call.1} parent=47 // pred_check_branch
          %346 = sbr.rel (%p344) target = $region60
        $region59: #{tpu_custom_call.1} parent=47 // pred_region
          %347 = dma.done [#allocation6], 320
        $region60: #{tpu_custom_call.1} parent=47 // pred_fallthru
          _
        // Predicated region
        $region61: #{tpu_custom_call.1} parent=47 // pred_check
          %p348 = pneg %p123
        $region62: #{tpu_custom_call.1} parent=47 // pred_check_branch
          %350 = sbr.rel (%p348) target = $region64
        $region63: #{tpu_custom_call.1} parent=47 // pred_region
          %351 = dma.done [#allocation9], 16
        $region64: #{tpu_custom_call.1} parent=47 // pred_fallthru
          _
        // Predicated region
        $region65: #{tpu_custom_call.1} parent=47 // pred_check
          %p352 = pneg %p144
        $region66: #{tpu_custom_call.1} parent=47 // pred_check_branch
          %354 = sbr.rel (%p352) target = $region68
        $region67: #{tpu_custom_call.1} parent=47 // pred_region
          %355 = dma.done [#allocation9], 16
        $region68: #{tpu_custom_call.1} parent=47 // pred_fallthru
          _
        // Predicated region
        $region69: #{tpu_custom_call.1} parent=47 // pred_check
          %p356 = pneg %p165
        $region70: #{tpu_custom_call.1} parent=47 // pred_check_branch
          %358 = sbr.rel (%p356) target = $region72
        $region71: #{tpu_custom_call.1} parent=47 // pred_region
          %359 = dma.done [#allocation12], 16
        $region72: #{tpu_custom_call.1} parent=47 // pred_fallthru
          _
        // Predicated region
        $region73: #{tpu_custom_call.1} parent=47 // pred_check
          %p360 = pneg %p186
        $region74: #{tpu_custom_call.1} parent=47 // pred_check_branch
          %362 = sbr.rel (%p360) target = $region76
        $region75: #{tpu_custom_call.1} parent=47 // pred_region
          %363 = dma.done [#allocation12], 16
        $region76: #{tpu_custom_call.1} parent=47 // pred_fallthru
          _
        %s364 = sand.u32 %s47, 1
        %s365 = scalar_lea.sflag [#allocation3], %s364
        %s366 = sand.u32 %s47, 1
        %s367 = smul.addr %s366, 256
        %s368 = scalar_lea.vmem [#allocation2], %s367
        %p369 = pneg %p60
        %p370 = pneg %p57
        %p371 = pneg %p81
        %p372 = pneg %p78
        %p373 = pneg %p102
        %p374 = pneg %p99
        %p375 = pneg %p123
        %p376 = pneg %p120
        %p377 = pneg %p144
        %p378 = pneg %p141
        %p379 = pneg %p165
        %p380 = pneg %p162
        %p381 = pneg %p186
        %p382 = pneg %p183
        %p383 = pneg %p214
        %p384 = pneg %p211
        %s385 = sand.u32 %s201, 1
        %s386 = scalar_lea.sflag [#allocation4], %s385
        %s387 = sand.u32 %s201, 1
        %s388 = smul.addr %s387, 128
        %s389 = scalar_lea.vmem [#allocation14], %s388
        %s390 = smul.u32 8, %s32
        %s392 = smul.u32 %s32, 8
        %s393 = smul.u32 %s392, 16
        %s394 = scalar_lea.vmem %s335, %s393 [#allocation2]
        %v395 = vld [vmem:[%s394] sm:$0xff]
        %v396 = vld [vmem:[%s394 + $0x8] sm:$0xff]
        %v397 = vld [vmem:[%s394 + $0x10] sm:$0xff]
        %v398 = vld [vmem:[%s394 + $0x18] sm:$0xff]
        %v399 = vld [vmem:[%s394 + $0x20] sm:$0xff]
        %v400 = vld [vmem:[%s394 + $0x28] sm:$0xff]
        %v401 = vld [vmem:[%s394 + $0x30] sm:$0xff]
        %v402 = vld [vmem:[%s394 + $0x38] sm:$0xff]
        %v403 = vld [vmem:[%s394 + $0x40] sm:$0xff]
        %v404 = vld [vmem:[%s394 + $0x48] sm:$0xff]
        %v405 = vld [vmem:[%s394 + $0x50] sm:$0xff]
        %v406 = vld [vmem:[%s394 + $0x58] sm:$0xff]
        %v407 = vld [vmem:[%s394 + $0x60] sm:$0xff]
        %v408 = vld [vmem:[%s394 + $0x68] sm:$0xff]
        %v409 = vld [vmem:[%s394 + $0x70] sm:$0xff]
        %v410 = vld [vmem:[%s394 + $0x78] sm:$0xff]
        %s411 = ssub.s32 %s392, 2
        %p412 = scmp.gt.s32.totalorder %s411, 0
        %s413 = scalar_select %p412, %s411, 0
        %s414 = smul.u32 %s413, 16
        %s415 = scalar_lea.vmem %s335, %s414 [#allocation2]
        %v416 = vld [vmem:[%s415] sm:$0xff]
        %v417 = vld [vmem:[%s415 + $0x8] sm:$0xff]
        %v418 = vld [vmem:[%s415 + $0x10] sm:$0xff]
        %v419 = vld [vmem:[%s415 + $0x18] sm:$0xff]
        %p420 = scmp.eq.s32.totalorder %s32, 0
        %s421 = scalar_select %p420, 1, 0
        %v422 = vstv %s421
        %vm423 = vcmp.eq.s32.totalorder %v422, 1
        %v424 = vsel %vm423, 0.0, %v416
        %v425 = vsel %vm423, 0.0, %v417
        %v426 = vsel %vm423, 0.0, %v418
        %v427 = vsel %vm423, 0.0, %v419
        %s428 = sadd.s32 %s392, 8
        %p429 = scmp.lt.s32.totalorder %s428, 14
        %s430 = scalar_select %p429, %s428, 14
        %s431 = smul.u32 %s430, 16
        %s432 = scalar_lea.vmem %s335, %s431 [#allocation2]
        %v433 = vld [vmem:[%s432] sm:$0xff]
        %v434 = vld [vmem:[%s432 + $0x8] sm:$0xff]
        %v435 = vld [vmem:[%s432 + $0x10] sm:$0xff]
        %v436 = vld [vmem:[%s432 + $0x18] sm:$0xff]
        %p437 = scmp.eq.s32.totalorder %s32, 1
        %s438 = scalar_select %p437, 1, 0
        %v439 = vstv %s438
        %vm440 = vcmp.eq.s32.totalorder %v439, 1
        %v441 = vsel %vm440, 0.0, %v433
        %v442 = vsel %vm440, 0.0, %v434
        %v443 = vsel %vm440, 0.0, %v435
        %v444 = vsel %vm440, 0.0, %v436
        %v445 = vpack.c.bf16 %v425, %v424
        %v446 = vpack.c.bf16 %v427, %v426
        %v447 = vpack.c.bf16 %v396, %v395
        %v448 = vpack.c.bf16 %v398, %v397
        %v449 = vpack.c.bf16 %v400, %v399
        %v450 = vpack.c.bf16 %v402, %v401
        %v451 = vpack.c.bf16 %v404, %v403
        %v452 = vpack.c.bf16 %v406, %v405
        %v453 = vpack.c.bf16 %v408, %v407
        %v454 = vpack.c.bf16 %v410, %v409
        %v455 = vpack.c.bf16 %v442, %v441
        %v456 = vpack.c.bf16 %v444, %v443
        %v458 = vshrl.u32 %v445, 16
        %v460 = vrot.slane %v458, 7
        %v461 = vshll.u32 %v445, 16
        %v463 = vor.u32 %v460, %v461
        %v465 = vshrl.u32 %v446, 16
        %v467 = vrot.slane %v465, 7
        %v468 = vshll.u32 %v446, 16
        %v470 = vor.u32 %v467, %v468
        %v472 = vshrl.u32 %v447, 16
        %v474 = vrot.slane %v472, 7
        %v475 = vshll.u32 %v447, 16
        %v477 = vor.u32 %v474, %v475
        %v479 = vshrl.u32 %v448, 16
        %v481 = vrot.slane %v479, 7
        %v482 = vshll.u32 %v448, 16
        %v484 = vor.u32 %v481, %v482
        %v486 = vshrl.u32 %v449, 16
        %v488 = vrot.slane %v486, 7
        %v489 = vshll.u32 %v449, 16
        %v491 = vor.u32 %v488, %v489
        %v493 = vshrl.u32 %v450, 16
        %v495 = vrot.slane %v493, 7
        %v496 = vshll.u32 %v450, 16
        %v498 = vor.u32 %v495, %v496
        %v500 = vshrl.u32 %v451, 16
        %v502 = vrot.slane %v500, 7
        %v503 = vshll.u32 %v451, 16
        %v505 = vor.u32 %v502, %v503
        %v507 = vshrl.u32 %v452, 16
        %v509 = vrot.slane %v507, 7
        %v510 = vshll.u32 %v452, 16
        %v512 = vor.u32 %v509, %v510
        %v514 = vshrl.u32 %v453, 16
        %v516 = vrot.slane %v514, 7
        %v517 = vshll.u32 %v453, 16
        %v519 = vor.u32 %v516, %v517
        %v521 = vshrl.u32 %v454, 16
        %v523 = vrot.slane %v521, 7
        %v524 = vshll.u32 %v454, 16
        %v526 = vor.u32 %v523, %v524
        %v528 = vshrl.u32 %v455, 16
        %v530 = vrot.slane %v528, 7
        %v531 = vshll.u32 %v455, 16
        %v533 = vor.u32 %v530, %v531
        %v535 = vshrl.u32 %v456, 16
        %v537 = vrot.slane %v535, 7
        %v538 = vshll.u32 %v456, 16
        %v540 = vor.u32 %v537, %v538
        %vm553 = vcmask 1040384
        %vm554 = vsmask.f32 256
        %vm555 = vmand %vm553, %vm554
        %v556 = vsel %vm555, 0, %v463
        %v557 = vsel %vm555, 0, %v470
        %v558 = vsel %vm555, 0, %v477
        %v559 = vsel %vm555, 0, %v484
        %v560 = vsel %vm555, 0, %v491
        %v561 = vsel %vm555, 0, %v498
        %v562 = vsel %vm555, 0, %v505
        %v563 = vsel %vm555, 0, %v512
        %v564 = vsel %vm555, 0, %v519
        %v565 = vsel %vm555, 0, %v526
        %v566 = vsel %vm555, 0, %v533
        %v567 = vsel %vm555, 0, %v540
        %v568 = vrot.slane %v461, 1
        %v569 = vor.u32 %v458, %v568
        %v570 = vrot.slane %v468, 1
        %v571 = vor.u32 %v465, %v570
        %v572 = vrot.slane %v475, 1
        %v573 = vor.u32 %v472, %v572
        %v574 = vrot.slane %v482, 1
        %v575 = vor.u32 %v479, %v574
        %v576 = vrot.slane %v489, 1
        %v577 = vor.u32 %v486, %v576
        %v578 = vrot.slane %v496, 1
        %v579 = vor.u32 %v493, %v578
        %v580 = vrot.slane %v503, 1
        %v581 = vor.u32 %v500, %v580
        %v582 = vrot.slane %v510, 1
        %v583 = vor.u32 %v507, %v582
        %v584 = vrot.slane %v517, 1
        %v585 = vor.u32 %v514, %v584
        %v586 = vrot.slane %v524, 1
        %v587 = vor.u32 %v521, %v586
        %v588 = vrot.slane %v531, 1
        %v589 = vor.u32 %v528, %v588
        %v590 = vrot.slane %v538, 1
        %v591 = vor.u32 %v535, %v590
        %vm604 = vcmask 1047552
        %vm605 = vsmask.f32 7424
        %vm606 = vmand %vm604, %vm605
        %v607 = vsel %vm606, %v569, 0
        %v608 = vsel %vm606, %v571, 0
        %v609 = vsel %vm606, %v573, 0
        %v610 = vsel %vm606, %v575, 0
        %v611 = vsel %vm606, %v577, 0
        %v612 = vsel %vm606, %v579, 0
        %v613 = vsel %vm606, %v581, 0
        %v614 = vsel %vm606, %v583, 0
        %v615 = vsel %vm606, %v585, 0
        %v616 = vsel %vm606, %v587, 0
        %v617 = vsel %vm606, %v589, 0
        %v618 = vsel %vm606, %v591, 0
        %631 = vrot.lane.b32.xlu0 %v445, 4
        %v632 = vpop.permute.xlu0 %631
        %633 = vrot.lane.b32.xlu0 %v446, 4
        %v634 = vpop.permute.xlu0 %633
        %635 = vrot.lane.b32.xlu0 %v447, 4
        %v636 = vpop.permute.xlu0 %635
        %637 = vrot.lane.b32.xlu0 %v448, 4
        %v638 = vpop.permute.xlu0 %637
        %639 = vrot.lane.b32.xlu0 %v449, 4
        %v640 = vpop.permute.xlu0 %639
        %641 = vrot.lane.b32.xlu0 %v450, 4
        %v642 = vpop.permute.xlu0 %641
        %643 = vrot.lane.b32.xlu0 %v451, 4
        %v644 = vpop.permute.xlu0 %643
        %645 = vrot.lane.b32.xlu0 %v452, 4
        %v646 = vpop.permute.xlu0 %645
        %647 = vrot.lane.b32.xlu0 %v453, 4
        %v648 = vpop.permute.xlu0 %647
        %649 = vrot.lane.b32.xlu0 %v454, 4
        %v650 = vpop.permute.xlu0 %649
        %651 = vrot.lane.b32.xlu0 %v455, 4
        %v652 = vpop.permute.xlu0 %651
        %653 = vrot.lane.b32.xlu0 %v456, 4
        %v654 = vpop.permute.xlu0 %653
        %667 = vrot.lane.b32.xlu0 %v607, 8
        %v668 = vpop.permute.xlu0 %667
        %669 = vrot.lane.b32.xlu0 %v608, 8
        %v670 = vpop.permute.xlu0 %669
        %671 = vrot.lane.b32.xlu0 %v609, 8
        %v672 = vpop.permute.xlu0 %671
        %673 = vrot.lane.b32.xlu0 %v610, 8
        %v674 = vpop.permute.xlu0 %673
        %675 = vrot.lane.b32.xlu0 %v611, 8
        %v676 = vpop.permute.xlu0 %675
        %677 = vrot.lane.b32.xlu0 %v612, 8
        %v678 = vpop.permute.xlu0 %677
        %679 = vrot.lane.b32.xlu0 %v613, 8
        %v680 = vpop.permute.xlu0 %679
        %681 = vrot.lane.b32.xlu0 %v614, 8
        %v682 = vpop.permute.xlu0 %681
        %683 = vrot.lane.b32.xlu0 %v615, 8
        %v684 = vpop.permute.xlu0 %683
        %685 = vrot.lane.b32.xlu0 %v616, 8
        %v686 = vpop.permute.xlu0 %685
        %687 = vrot.lane.b32.xlu0 %v617, 8
        %v688 = vpop.permute.xlu0 %687
        %689 = vrot.lane.b32.xlu0 %v618, 8
        %v690 = vpop.permute.xlu0 %689
        %vm691 = vcmask 31744
        %v694 = vsel %vm691, %v556, %v632
        %v697 = vsel %vm691, %v557, %v634
        %v700 = vsel %vm691, %v558, %v636
        %v703 = vsel %vm691, %v559, %v638
        %v706 = vsel %vm691, %v560, %v640
        %v709 = vsel %vm691, %v561, %v642
        %v712 = vsel %vm691, %v562, %v644
        %v715 = vsel %vm691, %v563, %v646
        %v718 = vsel %vm691, %v564, %v648
        %v721 = vsel %vm691, %v565, %v650
        %v724 = vsel %vm691, %v566, %v652
        %v727 = vsel %vm691, %v567, %v654
        %vm728 = vcmask 64512
        %v730 = vsel %vm728, %v694, %v668
        %v732 = vsel %vm728, %v697, %v670
        %v734 = vsel %vm728, %v700, %v672
        %v736 = vsel %vm728, %v703, %v674
        %v738 = vsel %vm728, %v706, %v676
        %v740 = vsel %vm728, %v709, %v678
        %v742 = vsel %vm728, %v712, %v680
        %v744 = vsel %vm728, %v715, %v682
        %v746 = vsel %vm728, %v718, %v684
        %v748 = vsel %vm728, %v721, %v686
        %v750 = vsel %vm728, %v724, %v688
        %v752 = vsel %vm728, %v727, %v690
        %763 = vrot.lane.b32.xlu0 %v732, 12
        %v764 = vpop.permute.xlu0 %763
        %765 = vrot.lane.b32.xlu0 %v734, 12
        %v766 = vpop.permute.xlu0 %765
        %767 = vrot.lane.b32.xlu0 %v736, 12
        %v768 = vpop.permute.xlu0 %767
        %769 = vrot.lane.b32.xlu0 %v738, 12
        %v770 = vpop.permute.xlu0 %769
        %771 = vrot.lane.b32.xlu0 %v740, 12
        %v772 = vpop.permute.xlu0 %771
        %773 = vrot.lane.b32.xlu0 %v742, 12
        %v774 = vpop.permute.xlu0 %773
        %775 = vrot.lane.b32.xlu0 %v744, 12
        %v776 = vpop.permute.xlu0 %775
        %777 = vrot.lane.b32.xlu0 %v746, 12
        %v778 = vpop.permute.xlu0 %777
        %779 = vrot.lane.b32.xlu0 %v748, 12
        %v780 = vpop.permute.xlu0 %779
        %781 = vrot.lane.b32.xlu0 %v750, 12
        %v782 = vpop.permute.xlu0 %781
        %784 = vrot.lane.b32.xlu0 %v734, 24
        %v785 = vpop.permute.xlu0 %784
        %786 = vrot.lane.b32.xlu0 %v736, 24
        %v787 = vpop.permute.xlu0 %786
        %788 = vrot.lane.b32.xlu0 %v738, 24
        %v789 = vpop.permute.xlu0 %788
        %790 = vrot.lane.b32.xlu0 %v740, 24
        %v791 = vpop.permute.xlu0 %790
        %792 = vrot.lane.b32.xlu0 %v742, 24
        %v793 = vpop.permute.xlu0 %792
        %794 = vrot.lane.b32.xlu0 %v744, 24
        %v795 = vpop.permute.xlu0 %794
        %796 = vrot.lane.b32.xlu0 %v746, 24
        %v797 = vpop.permute.xlu0 %796
        %798 = vrot.lane.b32.xlu0 %v748, 24
        %v799 = vpop.permute.xlu0 %798
        %800 = vrot.lane.b32.xlu0 %v750, 24
        %v801 = vpop.permute.xlu0 %800
        %802 = vrot.lane.b32.xlu0 %v752, 24
        %v803 = vpop.permute.xlu0 %802
        %vm804 = vcmask 97280
        %v806 = vsel %vm804, %v730, %v764
        %v808 = vsel %vm804, %v732, %v766
        %v810 = vsel %vm804, %v734, %v768
        %v812 = vsel %vm804, %v736, %v770
        %v814 = vsel %vm804, %v738, %v772
        %v816 = vsel %vm804, %v740, %v774
        %v818 = vsel %vm804, %v742, %v776
        %v820 = vsel %vm804, %v744, %v778
        %v822 = vsel %vm804, %v746, %v780
        %v824 = vsel %vm804, %v748, %v782
        %vm825 = vcmask 195584
        %v827 = vsel %vm825, %v806, %v785
        %v829 = vsel %vm825, %v808, %v787
        %v831 = vsel %vm825, %v810, %v789
        %v833 = vsel %vm825, %v812, %v791
        %v835 = vsel %vm825, %v814, %v793
        %v837 = vsel %vm825, %v816, %v795
        %v839 = vsel %vm825, %v818, %v797
        %v841 = vsel %vm825, %v820, %v799
        %v843 = vsel %vm825, %v822, %v801
        %v845 = vsel %vm825, %v824, %v803
        %v846 = vld [vmem:[#allocation5] sm:$0xf]
        %v847 = vld [vmem:[#allocation5 + $0x4] sm:$0xf]
        %v848 = vld [vmem:[#allocation5 + $0x8] sm:$0xf]
        %v849 = vld [vmem:[#allocation5 + $0xc] sm:$0xf]
        %v850 = vld [vmem:[#allocation5 + $0x10] sm:$0x3]
        %v856 = vunpack.c.l.b16 %v846
        %v857 = vunpack.c.l.b16 %v847
        %v858 = vunpack.c.l.b16 %v848
        %v859 = vunpack.c.l.b16 %v849
        %v860 = vunpack.c.l.b16 %v850
        %v861 = vpack.c.b16 %v857, %v856
        %v862 = vpack.c.b16 %v859, %v858
        %v863 = vpack.c.b16 %v860, %v860
        %vm866 = vcmask 293888
        %v867 = vsel %vm866, %v827, 0
        %v869 = vsel %vm866, %v829, 0
        %v871 = vsel %vm866, %v831, 0
        %v873 = vsel %vm866, %v833, 0
        %v875 = vsel %vm866, %v835, 0
        %v877 = vsel %vm866, %v837, 0
        %v879 = vsel %vm866, %v839, 0
        %v881 = vsel %vm866, %v841, 0
        %v883 = vsel %vm866, %v843, 0
        %v885 = vsel %vm866, %v845, 0
        %vm887 = vcmask 1041408
        %v889 = vsel %vm887, %v863, 0
        %891 = vmatprep.subr.bf16.mxu0 0
        %892 = vmatpush1.bf16.msra.mxu0 %v861
        %893 = vmatprep.subr.bf16.mxu0 0
        %894 = vmatpush1.bf16.msra.mxu0 %v862
        %895 = vmatprep.subr.bf16.mxu0 0
        %896 = vmatpush1.bf16.msra.mxu0 %v889
        %897 = vmatprep.subr.bf16.mxu0 0
        %898 = vmatpush1.bf16.msra.mxu0 0
        %899 = vmatprep.subr.bf16.mxu0 0
        %900 = vmatpush1.bf16.msra.mxu0 0
        %901 = vmatprep.subr.bf16.mxu0 0
        %902 = vmatpush1.bf16.msra.mxu0 0
        %903 = vmatprep.subr.bf16.mxu0 0
        %904 = vmatpush1.bf16.msra.mxu0 0
        %905 = vmatprep.subr.bf16.mxu0 0
        %906 = vmatpush1.bf16.msra.mxu0 0
        %907 = vmatprep.subr.bf16.mxu0 0
        %908 = vmatpush1.bf16.msra.mxu0 0
        %909 = vmatprep.subr.bf16.mxu0 0
        %910 = vmatpush1.bf16.msra.mxu0 0
        %911 = vmatprep.subr.bf16.mxu0 0
        %912 = vmatpush1.bf16.msra.mxu0 0
        %913 = vmatprep.subr.bf16.mxu0 0
        %914 = vmatpush1.bf16.msra.mxu0 0
        %915 = vmatprep.subr.bf16.mxu0 0
        %916 = vmatpush1.bf16.msra.mxu0 0
        %917 = vmatprep.subr.bf16.mxu0 0
        %918 = vmatpush1.bf16.msra.mxu0 0
        %919 = vmatprep.subr.bf16.mxu0 0
        %920 = vmatpush1.bf16.msra.mxu0 0
        %921 = vmatprep.subr.bf16.mxu0 0
        %922 = vmatpush1.bf16.msra.mxu0 0
        %923 = vmatprep.mubr.bf16.mxu0 0
        %924 = vmatmul.mubr.bf16.gmra.mrb[0].mxu0 %v867
        %v925 = vpop.f32.mrb[0].mxu0
        %v926 = vadd.f32 0.0, %v925
        %v927 = vpop.f32.mrb[0].mxu0
        %v928 = vpop.f32.mrb[0].mxu0
        %v929 = vadd.f32 0.0, %v928
        %v930 = vpop.f32.mrb[0].mxu0
        %931 = vmatprep.mubr.bf16.mxu0 0
        %932 = vmatmul.mubr.bf16.gmra.mrb[0].mxu0 %v869
        %v933 = vpop.f32.mrb[0].mxu0
        %v934 = vadd.f32 0.0, %v933
        %v935 = vpop.f32.mrb[0].mxu0
        %v936 = vpop.f32.mrb[0].mxu0
        %v937 = vadd.f32 0.0, %v936
        %v938 = vpop.f32.mrb[0].mxu0
        %939 = vmatprep.mubr.bf16.mxu0 0
        %940 = vmatmul.mubr.bf16.gmra.mrb[0].mxu0 %v871
        %v941 = vpop.f32.mrb[0].mxu0
        %v942 = vadd.f32 0.0, %v941
        %v943 = vpop.f32.mrb[0].mxu0
        %v944 = vpop.f32.mrb[0].mxu0
        %v945 = vadd.f32 0.0, %v944
        %v946 = vpop.f32.mrb[0].mxu0
        %947 = vmatprep.mubr.bf16.mxu0 0
        %948 = vmatmul.mubr.bf16.gmra.mrb[0].mxu0 %v873
        %v949 = vpop.f32.mrb[0].mxu0
        %v950 = vadd.f32 0.0, %v949
        %v951 = vpop.f32.mrb[0].mxu0
        %v952 = vpop.f32.mrb[0].mxu0
        %v953 = vadd.f32 0.0, %v952
        %v954 = vpop.f32.mrb[0].mxu0
        %955 = vmatprep.mubr.bf16.mxu0 0
        %956 = vmatmul.mubr.bf16.gmra.mrb[0].mxu0 %v875
        %v957 = vpop.f32.mrb[0].mxu0
        %v958 = vadd.f32 0.0, %v957
        %v959 = vpop.f32.mrb[0].mxu0
        %v960 = vpop.f32.mrb[0].mxu0
        %v961 = vadd.f32 0.0, %v960
        %v962 = vpop.f32.mrb[0].mxu0
        %963 = vmatprep.mubr.bf16.mxu0 0
        %964 = vmatmul.mubr.bf16.gmra.mrb[0].mxu0 %v877
        %v965 = vpop.f32.mrb[0].mxu0
        %v966 = vadd.f32 0.0, %v965
        %v967 = vpop.f32.mrb[0].mxu0
        %v968 = vpop.f32.mrb[0].mxu0
        %v969 = vadd.f32 0.0, %v968
        %v970 = vpop.f32.mrb[0].mxu0
        %971 = vmatprep.mubr.bf16.mxu0 0
        %972 = vmatmul.mubr.bf16.gmra.mrb[0].mxu0 %v879
        %v973 = vpop.f32.mrb[0].mxu0
        %v974 = vadd.f32 0.0, %v973
        %v975 = vpop.f32.mrb[0].mxu0
        %v976 = vpop.f32.mrb[0].mxu0
        %v977 = vadd.f32 0.0, %v976
        %v978 = vpop.f32.mrb[0].mxu0
        %979 = vmatprep.mubr.bf16.mxu0 0
        %980 = vmatmul.mubr.bf16.gmra.mrb[0].mxu0 %v881
        %v981 = vpop.f32.mrb[0].mxu0
        %v982 = vadd.f32 0.0, %v981
        %v983 = vpop.f32.mrb[0].mxu0
        %v984 = vpop.f32.mrb[0].mxu0
        %v985 = vadd.f32 0.0, %v984
        %v986 = vpop.f32.mrb[0].mxu0
        %987 = vmatprep.mubr.bf16.mxu0 0
        %988 = vmatmul.mubr.bf16.gmra.mrb[0].mxu0 %v883
        %v989 = vpop.f32.mrb[0].mxu0
        %v990 = vadd.f32 0.0, %v989
        %v991 = vpop.f32.mrb[0].mxu0
        %v992 = vpop.f32.mrb[0].mxu0
        %v993 = vadd.f32 0.0, %v992
        %v994 = vpop.f32.mrb[0].mxu0
        %995 = vmatprep.mubr.bf16.mxu0 0
        %996 = vmatmul.mubr.bf16.gmra.mrb[0].mxu0 %v885
        %v997 = vpop.f32.mrb[0].mxu0
        %v998 = vadd.f32 0.0, %v997
        %v999 = vpop.f32.mrb[0].mxu0
        %v1000 = vpop.f32.mrb[0].mxu0
        %v1001 = vadd.f32 0.0, %v1000
        %v1002 = vpop.f32.mrb[0].mxu0
        %1003 = vdwg.mxu0
        %v1004 = vld [vmem:[#allocation8] sm:$0x1]
        %v1006 = vlaneseq
        %v1007 = vshrl.u32 %v1006, 7
        %v1008 = vsub.s32 0, %v1007
        %v1009 = vrot.slane %v1004, %v1008
        %v1011 = vmul.f32 %v926, %v1009
        %v1012 = vmul.f32 %v929, %v1009
        %v1013 = vmul.f32 %v934, %v1009
        %v1014 = vmul.f32 %v937, %v1009
        %v1015 = vmul.f32 %v942, %v1009
        %v1016 = vmul.f32 %v945, %v1009
        %v1017 = vmul.f32 %v950, %v1009
        %v1018 = vmul.f32 %v953, %v1009
        %v1019 = vmul.f32 %v958, %v1009
        %v1020 = vmul.f32 %v961, %v1009
        %v1021 = vmul.f32 %v966, %v1009
        %v1022 = vmul.f32 %v969, %v1009
        %v1023 = vmul.f32 %v974, %v1009
        %v1024 = vmul.f32 %v977, %v1009
        %v1025 = vmul.f32 %v982, %v1009
        %v1026 = vmul.f32 %v985, %v1009
        %v1027 = vmul.f32 %v990, %v1009
        %v1028 = vmul.f32 %v993, %v1009
        %v1029 = vmul.f32 %v998, %v1009
        %v1030 = vmul.f32 %v1001, %v1009
        %v1031 = vld [vmem:[#allocation10] sm:$0x1]
        %v1033 = vlaneseq
        %v1034 = vshrl.u32 %v1033, 7
        %v1035 = vsub.s32 0, %v1034
        %v1036 = vrot.slane %v1031, %v1035
        %v1038 = vadd.f32 %v1011, %v1036
        %v1039 = vadd.f32 %v1012, %v1036
        %v1040 = vadd.f32 %v1013, %v1036
        %v1041 = vadd.f32 %v1014, %v1036
        %v1042 = vadd.f32 %v1015, %v1036
        %v1043 = vadd.f32 %v1016, %v1036
        %v1044 = vadd.f32 %v1017, %v1036
        %v1045 = vadd.f32 %v1018, %v1036
        %v1046 = vadd.f32 %v1019, %v1036
        %v1047 = vadd.f32 %v1020, %v1036
        %v1048 = vadd.f32 %v1021, %v1036
        %v1049 = vadd.f32 %v1022, %v1036
        %v1050 = vadd.f32 %v1023, %v1036
        %v1051 = vadd.f32 %v1024, %v1036
        %v1052 = vadd.f32 %v1025, %v1036
        %v1053 = vadd.f32 %v1026, %v1036
        %v1054 = vadd.f32 %v1027, %v1036
        %v1055 = vadd.f32 %v1028, %v1036
        %v1056 = vadd.f32 %v1029, %v1036
        %v1057 = vadd.f32 %v1030, %v1036
        %v1058 = vmax.f32 %v1038, 0.0
        %v1059 = vmax.f32 %v1039, 0.0
        %v1060 = vmax.f32 %v1040, 0.0
        %v1061 = vmax.f32 %v1041, 0.0
        %v1062 = vmax.f32 %v1042, 0.0
        %v1063 = vmax.f32 %v1043, 0.0
        %v1064 = vmax.f32 %v1044, 0.0
        %v1065 = vmax.f32 %v1045, 0.0
        %v1066 = vmax.f32 %v1046, 0.0
        %v1067 = vmax.f32 %v1047, 0.0
        %v1068 = vmax.f32 %v1048, 0.0
        %v1069 = vmax.f32 %v1049, 0.0
        %v1070 = vmax.f32 %v1050, 0.0
        %v1071 = vmax.f32 %v1051, 0.0
        %v1072 = vmax.f32 %v1052, 0.0
        %v1073 = vmax.f32 %v1053, 0.0
        %v1074 = vmax.f32 %v1054, 0.0
        %v1075 = vmax.f32 %v1055, 0.0
        %v1076 = vmax.f32 %v1056, 0.0
        %v1077 = vmax.f32 %v1057, 0.0
        %p1078 = scmp.gt.s32.totalorder %s32, 0
        %s1079 = scalar_select %p1078, 1, 0
        %v1080 = vstv %s1079
        %vm1081 = vcmp.eq.s32.totalorder %v1080, 1
        %p1082 = scmp.lt.s32.totalorder %s32, 1
        %s1083 = scalar_select %p1082, 1, 0
        %v1084 = vstv %s1083
        %vm1085 = vcmp.eq.s32.totalorder %v1084, 1
        %v1086 = vsel %vm1081, 1, 0
        %v1087 = vsel %vm1085, 1, 0
        %vm1088 = vcmp.eq.s32.totalorder %v1086, 1
        %vm1089 = vcmp.eq.s32.totalorder %v1087, 1
        %v1090 = vsel %vm1088, %v1058, 0.0
        %v1091 = vsel %vm1088, %v1059, 0.0
        %v1092 = vsel 1, %v1060, 0.0
        %v1093 = vsel 1, %v1061, 0.0
        %v1094 = vsel 1, %v1062, 0.0
        %v1095 = vsel 1, %v1063, 0.0
        %v1096 = vsel 1, %v1064, 0.0
        %v1097 = vsel 1, %v1065, 0.0
        %v1098 = vsel 1, %v1066, 0.0
        %v1099 = vsel 1, %v1067, 0.0
        %v1100 = vsel 1, %v1068, 0.0
        %v1101 = vsel 1, %v1069, 0.0
        %v1102 = vsel 1, %v1070, 0.0
        %v1103 = vsel 1, %v1071, 0.0
        %v1104 = vsel 1, %v1072, 0.0
        %v1105 = vsel 1, %v1073, 0.0
        %v1106 = vsel 1, %v1074, 0.0
        %v1107 = vsel 1, %v1075, 0.0
        %v1108 = vsel %vm1089, %v1076, 0.0
        %v1109 = vsel %vm1089, %v1077, 0.0
        %v1110 = vpack.c.bf16 %v1091, %v1090
        %v1111 = vpack.c.bf16 %v1093, %v1092
        %v1112 = vpack.c.bf16 %v1095, %v1094
        %v1113 = vpack.c.bf16 %v1097, %v1096
        %v1114 = vpack.c.bf16 %v1099, %v1098
        %v1115 = vpack.c.bf16 %v1101, %v1100
        %v1116 = vpack.c.bf16 %v1103, %v1102
        %v1117 = vpack.c.bf16 %v1105, %v1104
        %v1118 = vpack.c.bf16 %v1107, %v1106
        %v1119 = vpack.c.bf16 %v1109, %v1108
        %v1121 = vshrl.u32 %v1110, 16
        %v1123 = vrot.slane %v1121, 7
        %v1124 = vshll.u32 %v1110, 16
        %v1126 = vor.u32 %v1123, %v1124
        %v1128 = vshrl.u32 %v1111, 16
        %v1130 = vrot.slane %v1128, 7
        %v1131 = vshll.u32 %v1111, 16
        %v1133 = vor.u32 %v1130, %v1131
        %v1135 = vshrl.u32 %v1112, 16
        %v1137 = vrot.slane %v1135, 7
        %v1138 = vshll.u32 %v1112, 16
        %v1140 = vor.u32 %v1137, %v1138
        %v1142 = vshrl.u32 %v1113, 16
        %v1144 = vrot.slane %v1142, 7
        %v1145 = vshll.u32 %v1113, 16
        %v1147 = vor.u32 %v1144, %v1145
        %v1149 = vshrl.u32 %v1114, 16
        %v1151 = vrot.slane %v1149, 7
        %v1152 = vshll.u32 %v1114, 16
        %v1154 = vor.u32 %v1151, %v1152
        %v1156 = vshrl.u32 %v1115, 16
        %v1158 = vrot.slane %v1156, 7
        %v1159 = vshll.u32 %v1115, 16
        %v1161 = vor.u32 %v1158, %v1159
        %v1163 = vshrl.u32 %v1116, 16
        %v1165 = vrot.slane %v1163, 7
        %v1166 = vshll.u32 %v1116, 16
        %v1168 = vor.u32 %v1165, %v1166
        %v1170 = vshrl.u32 %v1117, 16
        %v1172 = vrot.slane %v1170, 7
        %v1173 = vshll.u32 %v1117, 16
        %v1175 = vor.u32 %v1172, %v1173
        %v1177 = vshrl.u32 %v1118, 16
        %v1179 = vrot.slane %v1177, 7
        %v1180 = vshll.u32 %v1118, 16
        %v1182 = vor.u32 %v1179, %v1180
        %v1184 = vshrl.u32 %v1119, 16
        %v1186 = vrot.slane %v1184, 7
        %v1187 = vshll.u32 %v1119, 16
        %v1189 = vor.u32 %v1186, %v1187
        %v1200 = vsel %vm555, 0, %v1126
        %v1201 = vsel %vm555, 0, %v1133
        %v1202 = vsel %vm555, 0, %v1140
        %v1203 = vsel %vm555, 0, %v1147
        %v1204 = vsel %vm555, 0, %v1154
        %v1205 = vsel %vm555, 0, %v1161
        %v1206 = vsel %vm555, 0, %v1168
        %v1207 = vsel %vm555, 0, %v1175
        %v1208 = vsel %vm555, 0, %v1182
        %v1209 = vsel %vm555, 0, %v1189
        %v1210 = vrot.slane %v1124, 1
        %v1211 = vor.u32 %v1121, %v1210
        %v1212 = vrot.slane %v1131, 1
        %v1213 = vor.u32 %v1128, %v1212
        %v1214 = vrot.slane %v1138, 1
        %v1215 = vor.u32 %v1135, %v1214
        %v1216 = vrot.slane %v1145, 1
        %v1217 = vor.u32 %v1142, %v1216
        %v1218 = vrot.slane %v1152, 1
        %v1219 = vor.u32 %v1149, %v1218
        %v1220 = vrot.slane %v1159, 1
        %v1221 = vor.u32 %v1156, %v1220
        %v1222 = vrot.slane %v1166, 1
        %v1223 = vor.u32 %v1163, %v1222
        %v1224 = vrot.slane %v1173, 1
        %v1225 = vor.u32 %v1170, %v1224
        %v1226 = vrot.slane %v1180, 1
        %v1227 = vor.u32 %v1177, %v1226
        %v1228 = vrot.slane %v1187, 1
        %v1229 = vor.u32 %v1184, %v1228
        %v1240 = vsel %vm606, %v1211, 0
        %v1241 = vsel %vm606, %v1213, 0
        %v1242 = vsel %vm606, %v1215, 0
        %v1243 = vsel %vm606, %v1217, 0
        %v1244 = vsel %vm606, %v1219, 0
        %v1245 = vsel %vm606, %v1221, 0
        %v1246 = vsel %vm606, %v1223, 0
        %v1247 = vsel %vm606, %v1225, 0
        %v1248 = vsel %vm606, %v1227, 0
        %v1249 = vsel %vm606, %v1229, 0
        %1260 = vrot.lane.b32.xlu0 %v1110, 4
        %v1261 = vpop.permute.xlu0 %1260
        %1262 = vrot.lane.b32.xlu0 %v1111, 4
        %v1263 = vpop.permute.xlu0 %1262
        %1264 = vrot.lane.b32.xlu0 %v1112, 4
        %v1265 = vpop.permute.xlu0 %1264
        %1266 = vrot.lane.b32.xlu0 %v1113, 4
        %v1267 = vpop.permute.xlu0 %1266
        %1268 = vrot.lane.b32.xlu0 %v1114, 4
        %v1269 = vpop.permute.xlu0 %1268
        %1270 = vrot.lane.b32.xlu0 %v1115, 4
        %v1271 = vpop.permute.xlu0 %1270
        %1272 = vrot.lane.b32.xlu0 %v1116, 4
        %v1273 = vpop.permute.xlu0 %1272
        %1274 = vrot.lane.b32.xlu0 %v1117, 4
        %v1275 = vpop.permute.xlu0 %1274
        %1276 = vrot.lane.b32.xlu0 %v1118, 4
        %v1277 = vpop.permute.xlu0 %1276
        %1278 = vrot.lane.b32.xlu0 %v1119, 4
        %v1279 = vpop.permute.xlu0 %1278
        %1290 = vrot.lane.b32.xlu0 %v1240, 8
        %v1291 = vpop.permute.xlu0 %1290
        %1292 = vrot.lane.b32.xlu0 %v1241, 8
        %v1293 = vpop.permute.xlu0 %1292
        %1294 = vrot.lane.b32.xlu0 %v1242, 8
        %v1295 = vpop.permute.xlu0 %1294
        %1296 = vrot.lane.b32.xlu0 %v1243, 8
        %v1297 = vpop.permute.xlu0 %1296
        %1298 = vrot.lane.b32.xlu0 %v1244, 8
        %v1299 = vpop.permute.xlu0 %1298
        %1300 = vrot.lane.b32.xlu0 %v1245, 8
        %v1301 = vpop.permute.xlu0 %1300
        %1302 = vrot.lane.b32.xlu0 %v1246, 8
        %v1303 = vpop.permute.xlu0 %1302
        %1304 = vrot.lane.b32.xlu0 %v1247, 8
        %v1305 = vpop.permute.xlu0 %1304
        %1306 = vrot.lane.b32.xlu0 %v1248, 8
        %v1307 = vpop.permute.xlu0 %1306
        %1308 = vrot.lane.b32.xlu0 %v1249, 8
        %v1309 = vpop.permute.xlu0 %1308
        %v1312 = vsel %vm691, %v1200, %v1261
        %v1315 = vsel %vm691, %v1201, %v1263
        %v1318 = vsel %vm691, %v1202, %v1265
        %v1321 = vsel %vm691, %v1203, %v1267
        %v1324 = vsel %vm691, %v1204, %v1269
        %v1327 = vsel %vm691, %v1205, %v1271
        %v1330 = vsel %vm691, %v1206, %v1273
        %v1333 = vsel %vm691, %v1207, %v1275
        %v1336 = vsel %vm691, %v1208, %v1277
        %v1339 = vsel %vm691, %v1209, %v1279
        %v1341 = vsel %vm728, %v1312, %v1291
        %v1343 = vsel %vm728, %v1315, %v1293
        %v1345 = vsel %vm728, %v1318, %v1295
        %v1347 = vsel %vm728, %v1321, %v1297
        %v1349 = vsel %vm728, %v1324, %v1299
        %v1351 = vsel %vm728, %v1327, %v1301
        %v1353 = vsel %vm728, %v1330, %v1303
        %v1355 = vsel %vm728, %v1333, %v1305
        %v1357 = vsel %vm728, %v1336, %v1307
        %v1359 = vsel %vm728, %v1339, %v1309
        %1368 = vrot.lane.b32.xlu0 %v1343, 12
        %v1369 = vpop.permute.xlu0 %1368
        %1370 = vrot.lane.b32.xlu0 %v1345, 12
        %v1371 = vpop.permute.xlu0 %1370
        %1372 = vrot.lane.b32.xlu0 %v1347, 12
        %v1373 = vpop.permute.xlu0 %1372
        %1374 = vrot.lane.b32.xlu0 %v1349, 12
        %v1375 = vpop.permute.xlu0 %1374
        %1376 = vrot.lane.b32.xlu0 %v1351, 12
        %v1377 = vpop.permute.xlu0 %1376
        %1378 = vrot.lane.b32.xlu0 %v1353, 12
        %v1379 = vpop.permute.xlu0 %1378
        %1380 = vrot.lane.b32.xlu0 %v1355, 12
        %v1381 = vpop.permute.xlu0 %1380
        %1382 = vrot.lane.b32.xlu0 %v1357, 12
        %v1383 = vpop.permute.xlu0 %1382
        %1385 = vrot.lane.b32.xlu0 %v1345, 24
        %v1386 = vpop.permute.xlu0 %1385
        %1387 = vrot.lane.b32.xlu0 %v1347, 24
        %v1388 = vpop.permute.xlu0 %1387
        %1389 = vrot.lane.b32.xlu0 %v1349, 24
        %v1390 = vpop.permute.xlu0 %1389
        %1391 = vrot.lane.b32.xlu0 %v1351, 24
        %v1392 = vpop.permute.xlu0 %1391
        %1393 = vrot.lane.b32.xlu0 %v1353, 24
        %v1394 = vpop.permute.xlu0 %1393
        %1395 = vrot.lane.b32.xlu0 %v1355, 24
        %v1396 = vpop.permute.xlu0 %1395
        %1397 = vrot.lane.b32.xlu0 %v1357, 24
        %v1398 = vpop.permute.xlu0 %1397
        %1399 = vrot.lane.b32.xlu0 %v1359, 24
        %v1400 = vpop.permute.xlu0 %1399
        %v1402 = vsel %vm804, %v1341, %v1369
        %v1404 = vsel %vm804, %v1343, %v1371
        %v1406 = vsel %vm804, %v1345, %v1373
        %v1408 = vsel %vm804, %v1347, %v1375
        %v1410 = vsel %vm804, %v1349, %v1377
        %v1412 = vsel %vm804, %v1351, %v1379
        %v1414 = vsel %vm804, %v1353, %v1381
        %v1416 = vsel %vm804, %v1355, %v1383
        %v1418 = vsel %vm825, %v1402, %v1386
        %v1420 = vsel %vm825, %v1404, %v1388
        %v1422 = vsel %vm825, %v1406, %v1390
        %v1424 = vsel %vm825, %v1408, %v1392
        %v1426 = vsel %vm825, %v1410, %v1394
        %v1428 = vsel %vm825, %v1412, %v1396
        %v1430 = vsel %vm825, %v1414, %v1398
        %v1432 = vsel %vm825, %v1416, %v1400
        %v1433 = vld [vmem:[#allocation7] sm:$0xf]
        %v1434 = vld [vmem:[#allocation7 + $0x4] sm:$0xf]
        %v1435 = vld [vmem:[#allocation7 + $0x8] sm:$0xf]
        %v1436 = vld [vmem:[#allocation7 + $0xc] sm:$0xf]
        %v1437 = vld [vmem:[#allocation7 + $0x10] sm:$0x3]
        %v1443 = vunpack.c.l.b16 %v1433
        %v1444 = vunpack.c.l.b16 %v1434
        %v1445 = vunpack.c.l.b16 %v1435
        %v1446 = vunpack.c.l.b16 %v1436
        %v1447 = vunpack.c.l.b16 %v1437
        %v1448 = vpack.c.b16 %v1444, %v1443
        %v1449 = vpack.c.b16 %v1446, %v1445
        %v1450 = vpack.c.b16 %v1447, %v1447
        %v1453 = vsel %vm866, %v1418, 0
        %v1455 = vsel %vm866, %v1420, 0
        %v1457 = vsel %vm866, %v1422, 0
        %v1459 = vsel %vm866, %v1424, 0
        %v1461 = vsel %vm866, %v1426, 0
        %v1463 = vsel %vm866, %v1428, 0
        %v1465 = vsel %vm866, %v1430, 0
        %v1467 = vsel %vm866, %v1432, 0
        %v1470 = vsel %vm887, %v1450, 0
        %1472 = vmatprep.subr.bf16.mxu0 0
        %1473 = vmatpush1.bf16.msra.mxu0 %v1448
        %1474 = vmatprep.subr.bf16.mxu0 0
        %1475 = vmatpush1.bf16.msra.mxu0 %v1449
        %1476 = vmatprep.subr.bf16.mxu0 0
        %1477 = vmatpush1.bf16.msra.mxu0 %v1470
        %1478 = vmatprep.subr.bf16.mxu0 0
        %1479 = vmatpush1.bf16.msra.mxu0 0
        %1480 = vmatprep.subr.bf16.mxu0 0
        %1481 = vmatpush1.bf16.msra.mxu0 0
        %1482 = vmatprep.subr.bf16.mxu0 0
        %1483 = vmatpush1.bf16.msra.mxu0 0
        %1484 = vmatprep.subr.bf16.mxu0 0
        %1485 = vmatpush1.bf16.msra.mxu0 0
        %1486 = vmatprep.subr.bf16.mxu0 0
        %1487 = vmatpush1.bf16.msra.mxu0 0
        %1488 = vmatprep.subr.bf16.mxu0 0
        %1489 = vmatpush1.bf16.msra.mxu0 0
        %1490 = vmatprep.subr.bf16.mxu0 0
        %1491 = vmatpush1.bf16.msra.mxu0 0
        %1492 = vmatprep.subr.bf16.mxu0 0
        %1493 = vmatpush1.bf16.msra.mxu0 0
        %1494 = vmatprep.subr.bf16.mxu0 0
        %1495 = vmatpush1.bf16.msra.mxu0 0
        %1496 = vmatprep.subr.bf16.mxu0 0
        %1497 = vmatpush1.bf16.msra.mxu0 0
        %1498 = vmatprep.subr.bf16.mxu0 0
        %1499 = vmatpush1.bf16.msra.mxu0 0
        %1500 = vmatprep.subr.bf16.mxu0 0
        %1501 = vmatpush1.bf16.msra.mxu0 0
        %1502 = vmatprep.subr.bf16.mxu0 0
        %1503 = vmatpush1.bf16.msra.mxu0 0
        %1504 = vmatprep.mubr.bf16.mxu0 0
        %1505 = vmatmul.mubr.bf16.gmra.mrb[0].mxu0 %v1453
        %v1506 = vpop.f32.mrb[0].mxu0
        %v1507 = vadd.f32 0.0, %v1506
        %v1508 = vpop.f32.mrb[0].mxu0
        %v1509 = vpop.f32.mrb[0].mxu0
        %v1510 = vadd.f32 0.0, %v1509
        %v1511 = vpop.f32.mrb[0].mxu0
        %1512 = vmatprep.mubr.bf16.mxu0 0
        %1513 = vmatmul.mubr.bf16.gmra.mrb[0].mxu0 %v1455
        %v1514 = vpop.f32.mrb[0].mxu0
        %v1515 = vadd.f32 0.0, %v1514
        %v1516 = vpop.f32.mrb[0].mxu0
        %v1517 = vpop.f32.mrb[0].mxu0
        %v1518 = vadd.f32 0.0, %v1517
        %v1519 = vpop.f32.mrb[0].mxu0
        %1520 = vmatprep.mubr.bf16.mxu0 0
        %1521 = vmatmul.mubr.bf16.gmra.mrb[0].mxu0 %v1457
        %v1522 = vpop.f32.mrb[0].mxu0
        %v1523 = vadd.f32 0.0, %v1522
        %v1524 = vpop.f32.mrb[0].mxu0
        %v1525 = vpop.f32.mrb[0].mxu0
        %v1526 = vadd.f32 0.0, %v1525
        %v1527 = vpop.f32.mrb[0].mxu0
        %1528 = vmatprep.mubr.bf16.mxu0 0
        %1529 = vmatmul.mubr.bf16.gmra.mrb[0].mxu0 %v1459
        %v1530 = vpop.f32.mrb[0].mxu0
        %v1531 = vadd.f32 0.0, %v1530
        %v1532 = vpop.f32.mrb[0].mxu0
        %v1533 = vpop.f32.mrb[0].mxu0
        %v1534 = vadd.f32 0.0, %v1533
        %v1535 = vpop.f32.mrb[0].mxu0
        %1536 = vmatprep.mubr.bf16.mxu0 0
        %1537 = vmatmul.mubr.bf16.gmra.mrb[0].mxu0 %v1461
        %v1538 = vpop.f32.mrb[0].mxu0
        %v1539 = vadd.f32 0.0, %v1538
        %v1540 = vpop.f32.mrb[0].mxu0
        %v1541 = vpop.f32.mrb[0].mxu0
        %v1542 = vadd.f32 0.0, %v1541
        %v1543 = vpop.f32.mrb[0].mxu0
        %1544 = vmatprep.mubr.bf16.mxu0 0
        %1545 = vmatmul.mubr.bf16.gmra.mrb[0].mxu0 %v1463
        %v1546 = vpop.f32.mrb[0].mxu0
        %v1547 = vadd.f32 0.0, %v1546
        %v1548 = vpop.f32.mrb[0].mxu0
        %v1549 = vpop.f32.mrb[0].mxu0
        %v1550 = vadd.f32 0.0, %v1549
        %v1551 = vpop.f32.mrb[0].mxu0
        %1552 = vmatprep.mubr.bf16.mxu0 0
        %1553 = vmatmul.mubr.bf16.gmra.mrb[0].mxu0 %v1465
        %v1554 = vpop.f32.mrb[0].mxu0
        %v1555 = vadd.f32 0.0, %v1554
        %v1556 = vpop.f32.mrb[0].mxu0
        %v1557 = vpop.f32.mrb[0].mxu0
        %v1558 = vadd.f32 0.0, %v1557
        %v1559 = vpop.f32.mrb[0].mxu0
        %1560 = vmatprep.mubr.bf16.mxu0 0
        %1561 = vmatmul.mubr.bf16.gmra.mrb[0].mxu0 %v1467
        %v1562 = vpop.f32.mrb[0].mxu0
        %v1563 = vadd.f32 0.0, %v1562
        %v1564 = vpop.f32.mrb[0].mxu0
        %v1565 = vpop.f32.mrb[0].mxu0
        %v1566 = vadd.f32 0.0, %v1565
        %v1567 = vpop.f32.mrb[0].mxu0
        %1568 = vdwg.mxu0
        %v1569 = vld [vmem:[#allocation11] sm:$0x1]
        %v1571 = vlaneseq
        %v1572 = vshrl.u32 %v1571, 7
        %v1573 = vsub.s32 0, %v1572
        %v1574 = vrot.slane %v1569, %v1573
        %v1576 = vmul.f32 %v1507, %v1574
        %v1577 = vmul.f32 %v1510, %v1574
        %v1578 = vmul.f32 %v1515, %v1574
        %v1579 = vmul.f32 %v1518, %v1574
        %v1580 = vmul.f32 %v1523, %v1574
        %v1581 = vmul.f32 %v1526, %v1574
        %v1582 = vmul.f32 %v1531, %v1574
        %v1583 = vmul.f32 %v1534, %v1574
        %v1584 = vmul.f32 %v1539, %v1574
        %v1585 = vmul.f32 %v1542, %v1574
        %v1586 = vmul.f32 %v1547, %v1574
        %v1587 = vmul.f32 %v1550, %v1574
        %v1588 = vmul.f32 %v1555, %v1574
        %v1589 = vmul.f32 %v1558, %v1574
        %v1590 = vmul.f32 %v1563, %v1574
        %v1591 = vmul.f32 %v1566, %v1574
        %v1592 = vld [vmem:[#allocation13] sm:$0x1]
        %v1594 = vlaneseq
        %v1595 = vshrl.u32 %v1594, 7
        %v1596 = vsub.s32 0, %v1595
        %v1597 = vrot.slane %v1592, %v1596
        %v1599 = vadd.f32 %v1576, %v1597
        %v1600 = vadd.f32 %v1577, %v1597
        %v1601 = vadd.f32 %v1578, %v1597
        %v1602 = vadd.f32 %v1579, %v1597
        %v1603 = vadd.f32 %v1580, %v1597
        %v1604 = vadd.f32 %v1581, %v1597
        %v1605 = vadd.f32 %v1582, %v1597
        %v1606 = vadd.f32 %v1583, %v1597
        %v1607 = vadd.f32 %v1584, %v1597
        %v1608 = vadd.f32 %v1585, %v1597
        %v1609 = vadd.f32 %v1586, %v1597
        %v1610 = vadd.f32 %v1587, %v1597
        %v1611 = vadd.f32 %v1588, %v1597
        %v1612 = vadd.f32 %v1589, %v1597
        %v1613 = vadd.f32 %v1590, %v1597
        %v1614 = vadd.f32 %v1591, %v1597
        %v1615 = vadd.f32 %v1599, %v395
        %v1616 = vadd.f32 %v1600, %v396
        %v1617 = vadd.f32 %v1601, %v397
        %v1618 = vadd.f32 %v1602, %v398
        %v1619 = vadd.f32 %v1603, %v399
        %v1620 = vadd.f32 %v1604, %v400
        %v1621 = vadd.f32 %v1605, %v401
        %v1622 = vadd.f32 %v1606, %v402
        %v1623 = vadd.f32 %v1607, %v403
        %v1624 = vadd.f32 %v1608, %v404
        %v1625 = vadd.f32 %v1609, %v405
        %v1626 = vadd.f32 %v1610, %v406
        %v1627 = vadd.f32 %v1611, %v407
        %v1628 = vadd.f32 %v1612, %v408
        %v1629 = vadd.f32 %v1613, %v409
        %v1630 = vadd.f32 %v1614, %v410
        %v1631 = vmax.f32 %v1615, 0.0
        %v1632 = vmax.f32 %v1616, 0.0
        %v1633 = vmax.f32 %v1617, 0.0
        %v1634 = vmax.f32 %v1618, 0.0
        %v1635 = vmax.f32 %v1619, 0.0
        %v1636 = vmax.f32 %v1620, 0.0
        %v1637 = vmax.f32 %v1621, 0.0
        %v1638 = vmax.f32 %v1622, 0.0
        %v1639 = vmax.f32 %v1623, 0.0
        %v1640 = vmax.f32 %v1624, 0.0
        %v1641 = vmax.f32 %v1625, 0.0
        %v1642 = vmax.f32 %v1626, 0.0
        %v1643 = vmax.f32 %v1627, 0.0
        %v1644 = vmax.f32 %v1628, 0.0
        %v1645 = vmax.f32 %v1629, 0.0
        %v1646 = vmax.f32 %v1630, 0.0
        %1647 = vst.msk [vmem:[%s389] sm:$0xff] %vm691, %v1631
        %1648 = vst.msk [vmem:[%s389 + $0x8] sm:$0xff] %vm691, %v1632
        %1649 = vst.msk [vmem:[%s389 + $0x10] sm:$0xff] %vm691, %v1633
        %1650 = vst.msk [vmem:[%s389 + $0x18] sm:$0xff] %vm691, %v1634
        %1651 = vst.msk [vmem:[%s389 + $0x20] sm:$0xff] %vm691, %v1635
        %1652 = vst.msk [vmem:[%s389 + $0x28] sm:$0xff] %vm691, %v1636
        %1653 = vst.msk [vmem:[%s389 + $0x30] sm:$0xff] %vm691, %v1637
        %1654 = vst.msk [vmem:[%s389 + $0x38] sm:$0xff] %vm691, %v1638
        %1655 = vst.msk [vmem:[%s389 + $0x40] sm:$0xff] %vm691, %v1639
        %1656 = vst.msk [vmem:[%s389 + $0x48] sm:$0xff] %vm691, %v1640
        %1657 = vst.msk [vmem:[%s389 + $0x50] sm:$0xff] %vm691, %v1641
        %1658 = vst.msk [vmem:[%s389 + $0x58] sm:$0xff] %vm691, %v1642
        %1659 = vst.msk [vmem:[%s389 + $0x60] sm:$0xff] %vm691, %v1643
        %1660 = vst.msk [vmem:[%s389 + $0x68] sm:$0xff] %vm691, %v1644
        %1661 = vst.msk [vmem:[%s389 + $0x70] sm:$0xff] %vm691, %v1645
        %1662 = vst.msk [vmem:[%s389 + $0x78] sm:$0xff] %vm691, %v1646
        %s1663 = sand.u32 %s201, 1
        %s1664 = scalar_lea.sflag [#allocation4], %s1663
        %s1665 = sand.u32 %s201, 1
        %s1666 = smul.addr %s1665, 128
        %s1667 = scalar_lea.vmem [#allocation14], %s1666
        // Predicated region
        $region77: #{tpu_custom_call.1} parent=47 // pred_check
          %p1668 = pneg %p211
        $region78: #{tpu_custom_call.1} parent=47 // pred_check_branch
          %1670 = sbr.rel (%p1668) target = $region80
        $region79: #{tpu_custom_call.1} parent=47 // pred_region
          %s1671 = smul.u32 8, %s32
          %s1673 = ssub.s32 2048, 2048
          %1674 = vsyncadd %s1664, %s1673
          %s1675 = smul.addr %s1671, 2
          %s1676 = smul.addr %s31, 32
          %s1677 = sadd.s32 %s1675, %s1676
          %s1678 = smul.addr %s1677, 128
          %s1679 = scalar_lea.hbm %s7, %s1678
          %s1680 = sshll.u32 %s1667, 4
          %s1681 = int_to_ptr.vmem [resolvable:$true] %s1680
          %1686 = dma.vmem_to_hbm [thread:$0]  %s1681, 2048, %s1679, %s1664, 128, 128, 8
        $region80: #{tpu_custom_call.1} parent=47 // pred_fallthru
          _
      $region48: #{tpu_custom_call.1} parent=5 // pred_fallthru
        _
      %p1687 = scmp.le.s32.totalorder 2, %s22
      // Predicated region
      $region81: #{tpu_custom_call.1} parent=5 // pred_check
        %p1688 = pneg %p1687
      $region82: #{tpu_custom_call.1} parent=5 // pred_check_branch
        %1690 = sbr.rel (%p1688) target = $region84
      $region83: #{tpu_custom_call.1} parent=5 // pred_region
        %s1691 = ssub.s32 %s22, 2
        // Predicated region
        $region85: #{tpu_custom_call.1} parent=83 // pred_check
          %p1692 = pneg %p217
        $region86: #{tpu_custom_call.1} parent=83 // pred_check_branch
          %1694 = sbr.rel (%p1692) target = $region88
        $region87: #{tpu_custom_call.1} parent=83 // pred_region
          %s1695 = sand.u32 %s202, 1
          %s1696 = scalar_lea.sflag [#allocation4], %s1695
          %s1697 = sand.u32 %s202, 1
          %s1698 = smul.addr %s1697, 128
          %s1699 = scalar_lea.vmem [#allocation14], %s1698
          %1700 = dma.done %s1696, 2048
        $region88: #{tpu_custom_call.1} parent=83 // pred_fallthru
          _
      $region84: #{tpu_custom_call.1} parent=5 // pred_fallthru
        _
    $region6: #{tpu_custom_call.1} parent=1 // loop_footer
      %s26 = sadd.s32 1, %s22
    $region7: #{tpu_custom_call.1} parent=1 // loop_footer_branch
      %21 = sbr.rel target = $region3
    $region8: #{tpu_custom_call.1} parent=1 // loop_exit
      _
    %1701 = vsyncpa [#allocation3], 1
    %s1702 = scalar_lea.sflag [#allocation3], 1
    %1703 = vsyncpa %s1702, 1
    %1704 = vsyncpa [#allocation6], 1
    %1705 = vsyncpa [#allocation9], 1
    %1706 = vsyncpa [#allocation12], 1
    %1707 = vsyncpa [#allocation4], 1
    %s1708 = scalar_lea.sflag [#allocation4], 1
    %1709 = vsyncpa %s1708, 1

</llo_original>
